<compile_context>
chip_gen: v5e
topology: v5e:2x2
jax: 0.10.0
libtpu: 0.0.40
codegen_flags: <defaults>
</compile_context>

<pallas_src>
import functools
import math

import jax
import jax.numpy as jnp
import numpy as np
from jax import lax
from jax.experimental import pallas as pl
from jax.experimental.pallas import tpu as pltpu

EPS = 1e-5


# --------------------------------------------------------------------------
# Fused Pallas kernel: attention blend + 3x (conv3x3 + folded BN + ReLU)
# Whole batch processed in one step; layout is (channels, N*H*W) = sublanes x lanes.
# --------------------------------------------------------------------------
def _atten_fused_kernel(xyz_ref, mask_ref,
                        a1w_ref, a1b_ref, a2w_ref, a2b_ref, a3w_ref, a3b_ref,
                        c1w_ref, c1b_ref, c2w_ref, c2b_ref, c3w_ref, c3b_ref,
                        out_ref, *, C, W):
    f32 = jnp.float32

    def dot(a, b):
        return jnp.dot(a, b, preferred_element_type=f32)

    xyz = xyz_ref[...]                       # (3C, L)  L = N*H*W
    x = xyz[0:C, :]
    y = xyz[C:2 * C, :]
    z = xyz[2 * C:3 * C, :]

    # ---- attention branch: fused 1x1 convs (+folded BN), ReLU, sigmoid ----
    a = jnp.maximum(dot(a1w_ref[...], xyz) + a1b_ref[...], 0.0)       # (C, L)
    a = jnp.maximum(dot(a2w_ref[...], a) + a2b_ref[...], 0.0)         # (C, L)
    att = jax.nn.sigmoid(dot(a3w_ref[...], a) + a3b_ref[...])         # (3, L)

    # 3-way blend: attention maps are sublane rows broadcast across channels.
    act = x * att[0:1, :] + y * att[1:2, :] + z * att[2:3, :]         # (C, L)

    masks = mask_ref[...]                                             # (9, L) f32

    # ---- 3x3 conv (+folded BN) + ReLU as ONE matmul over a stacked operand -
    def conv3x3_bn_relu(inp, w_ref, b_ref):
        # Stacked operand (9*Cin, L): tap-major (t = kh*3+kw), Cin-minor,
        # matching the (Cout, 9*Cin) folded weight layout from fold_params.
        parts = []
        for kh in range(3):
            for kw in range(3):
                t = kh * 3 + kw
                d = (kh - 1) * W + (kw - 1)
                # shifted[:, l] = inp[:, l + d]; invalid / wrapped taps are
                # zeroed by the precomputed destination-pixel mask.
                shifted = inp if d == 0 else jnp.roll(inp, -d, axis=1)
                parts.append(shifted * masks[t:t + 1, :])
        stacked = jnp.concatenate(parts, axis=0)                      # (9*Cin, L)
        return jnp.maximum(dot(w_ref[...], stacked) + b_ref[...], 0.0)

    t1 = conv3x3_bn_relu(act, c1w_ref, c1b_ref)       # (2C, L)
    t2 = conv3x3_bn_relu(t1, c2w_ref, c2b_ref)        # (2C, L)
    t3 = conv3x3_bn_relu(t2, c3w_ref, c3b_ref)        # (C,  L)
    out_ref[...] = t3.astype(out_ref.dtype)


# --------------------------------------------------------------------------
# Forward-pass wrapper: single pallas_call, single grid step
# --------------------------------------------------------------------------
def _build_masks(N, H, W):
    """(9, N*H*W) float32 tap-validity masks keyed on (lane % HW)."""
    HW = H * W
    col = jnp.arange(N * HW, dtype=jnp.int32)
    pos = col % HW
    i = pos // W
    j = pos % W
    rows = []
    for kh in range(3):
        for kw in range(3):
            dh, dw = kh - 1, kw - 1
            rows.append((i + dh >= 0) & (i + dh < H) & (j + dw >= 0) & (j + dw < W))
    return jnp.stack(rows, axis=0).astype(jnp.float32)


def _atten_forward_impl(kp, x, y, z):
    N, C, H, W = x.shape
    L = N * H * W

    def to_lanes(t):                           # (N,C,H,W) -> (C, N*H*W)
        return jnp.transpose(t, (1, 0, 2, 3)).reshape(C, L)

    xyz = jnp.concatenate([to_lanes(x), to_lanes(y), to_lanes(z)], axis=0)  # (3C, L)
    masks = _build_masks(N, H, W)

    weights = [kp['a1w'], kp['a1b'], kp['a2w'], kp['a2b'], kp['a3w'], kp['a3b'],
               kp['c1w'], kp['c1b'], kp['c2w'], kp['c2b'], kp['c3w'], kp['c3b']]

    def full_spec(a):
        nd = a.ndim
        return pl.BlockSpec(a.shape, lambda n, _nd=nd: (0,) * _nd)

    kernel = functools.partial(_atten_fused_kernel, C=C, W=W)
    out = pl.pallas_call(
        kernel,
        out_shape=jax.ShapeDtypeStruct((C, L), x.dtype),
        grid=(1,),
        in_specs=[full_spec(xyz), full_spec(masks)] + [full_spec(w) for w in weights],
        out_specs=pl.BlockSpec((C, L), lambda n: (0, 0)),
        compiler_params=pltpu.CompilerParams(dimension_semantics=("arbitrary",)),
    )(xyz, masks, *weights)
    return jnp.transpose(out.reshape(C, N, H, W), (1, 0, 2, 3))


atten_forward = jax.jit(_atten_forward_impl)


# --------------------------------------------------------------------------
# Parameters (deterministic synthetic init) and one-time BN folding
# --------------------------------------------------------------------------
def init_params(channel, key):
    ks = iter(jax.random.split(key, 32))

    def conv_w(cout, cin, k):
        fan = cin * k * k
        return jax.random.normal(next(ks), (cout, cin, k, k), jnp.float32) / math.sqrt(fan)

    def bn(c):
        return dict(
            gamma=1.0 + 0.1 * jax.random.normal(next(ks), (c,), jnp.float32),
            beta=0.1 * jax.random.normal(next(ks), (c,), jnp.float32),
            mean=0.1 * jax.random.normal(next(ks), (c,), jnp.float32),
            var=jax.random.uniform(next(ks), (c,), jnp.float32, minval=0.5, maxval=1.5),
        )

    C = channel
    p = {}
    p['att1_w'] = conv_w(C, 3 * C, 1)
    p['att1_b'] = 0.1 * jax.random.normal(next(ks), (C,), jnp.float32)
    p['att1_bn'] = bn(C)
    p['att2_w'] = conv_w(C, C, 1)
    p['att2_b'] = 0.1 * jax.random.normal(next(ks), (C,), jnp.float32)
    p['att2_bn'] = bn(C)
    p['att3_w'] = conv_w(3, C, 1)
    p['att3_b'] = 0.1 * jax.random.normal(next(ks), (3,), jnp.float32)
    p['conv1_w'] = conv_w(2 * C, C, 3)
    p['conv1_bn'] = bn(2 * C)
    p['conv2_w'] = conv_w(2 * C, 2 * C, 3)
    p['conv2_bn'] = bn(2 * C)
    p['conv3_w'] = conv_w(C, 2 * C, 3)
    p['conv3_bn'] = bn(C)
    return p


def fold_params(params):
    """Fold eval-mode BN into matmul-ready weights; done ONCE, outside forward."""
    def bn_scale_shift(bn, bias=None):
        scale = bn['gamma'] / jnp.sqrt(bn['var'] + EPS)
        b = bias if bias is not None else 0.0
        shift = (b - bn['mean']) * scale + bn['beta']
        return scale, shift

    kp = {}
    s, sh = bn_scale_shift(params['att1_bn'], params['att1_b'])
    kp['a1w'] = params['att1_w'][:, :, 0, 0] * s[:, None]          # (C, 3C)
    kp['a1b'] = sh[:, None]

    s, sh = bn_scale_shift(params['att2_bn'], params['att2_b'])
    kp['a2w'] = params['att2_w'][:, :, 0, 0] * s[:, None]          # (C, C)
    kp['a2b'] = sh[:, None]

    kp['a3w'] = params['att3_w'][:, :, 0, 0]                       # (3, C), no BN
    kp['a3b'] = params['att3_b'][:, None]

    def fold_conv(w_oihw, bn):
        s, sh = bn_scale_shift(bn, None)
        w = w_oihw * s[:, None, None, None]                        # (Cout, Cin, 3, 3)
        cout, cin = w.shape[0], w.shape[1]
        # (Cout, kh, kw, Cin) -> (Cout, 9*Cin): tap-major (t=kh*3+kw), Cin-minor.
        w = jnp.transpose(w, (0, 2, 3, 1)).reshape(cout, 9 * cin)
        return w, sh[:, None]

    kp['c1w'], kp['c1b'] = fold_conv(params['conv1_w'], params['conv1_bn'])
    kp['c2w'], kp['c2b'] = fold_conv(params['conv2_w'], params['conv2_bn'])
    kp['c3w'], kp['c3b'] = fold_conv(params['conv3_w'], params['conv3_bn'])
    return kp


# --------------------------------------------------------------------------
# Pure-JAX reference (eval-mode BN), mirrors the PyTorch module
# --------------------------------------------------------------------------
def reference_forward(params, x, y, z):
    def bn_eval(t, bn):
        scale = bn['gamma'] / jnp.sqrt(bn['var'] + EPS)
        shift = bn['beta'] - bn['mean'] * scale
        return t * scale[None, :, None, None] + shift[None, :, None, None]

    def conv(t, w, pad):
        return lax.conv_general_dilated(
            t, w, (1, 1), [(pad, pad), (pad, pad)],
            dimension_numbers=('NCHW', 'OIHW', 'NCHW'))

    relu = lambda t: jnp.maximum(t, 0.0)
    tmp = jnp.concatenate([x, y, z], axis=1)
    a = relu(bn_eval(conv(tmp, params['att1_w'], 0)
                     + params['att1_b'][None, :, None, None], params['att1_bn']))
    a = relu(bn_eval(conv(a, params['att2_w'], 0)
                     + params['att2_b'][None, :, None, None], params['att2_bn']))
    a = jax.nn.sigmoid(conv(a, params['att3_w'], 0)
                       + params['att3_b'][None, :, None, None])
    out = x * a[:, 0:1] + y * a[:, 1:2] + z * a[:, 2:3]
    out = relu(bn_eval(conv(out, params['conv1_w'], 1), params['conv1_bn']))
    out = relu(bn_eval(conv(out, params['conv2_w'], 1), params['conv2_bn']))
    out = relu(bn_eval(conv(out, params['conv3_w'], 1), params['conv3_bn']))
    return out


# --------------------------------------------------------------------------
if __name__ == "__main__":
    C, N, H, W = 4, 2, 16, 16
    key = jax.random.PRNGKey(0)
    kx, ky, kz, kp_key = jax.random.split(key, 4)
    x = jax.random.normal(kx, (N, C, H, W), jnp.float32)
    y = jax.random.normal(ky, (N, C, H, W), jnp.float32)
    z = jax.random.normal(kz, (N, C, H, W), jnp.float32)
    params = init_params(C, kp_key)

    kparams = fold_params(params)             # BN folding hoisted out of forward
    out = atten_forward(kparams, x, y, z)
    out = jax.block_until_ready(out)

    ref = reference_forward(params, x, y, z)
    assert out.shape == ref.shape == (N, C, H, W)
    np.testing.assert_allclose(np.asarray(out), np.asarray(ref), rtol=2e-3, atol=2e-3)
    print("KERNEL_OK")
</pallas_src>

<mosaic_0001>
module attributes {stable_mosaic.version = 11 : i64} {
  func.func @_atten_fused_kernel(%arg0: i32, %arg1: memref<12x512xf32, #tpu.memory_space<vmem>>, %arg2: memref<9x512xf32, #tpu.memory_space<vmem>>, %arg3: memref<4x12xf32, #tpu.memory_space<vmem>>, %arg4: memref<4x1xf32, #tpu.memory_space<vmem>>, %arg5: memref<4x4xf32, #tpu.memory_space<vmem>>, %arg6: memref<4x1xf32, #tpu.memory_space<vmem>>, %arg7: memref<3x4xf32, #tpu.memory_space<vmem>>, %arg8: memref<3x1xf32, #tpu.memory_space<vmem>>, %arg9: memref<8x36xf32, #tpu.memory_space<vmem>>, %arg10: memref<8x1xf32, #tpu.memory_space<vmem>>, %arg11: memref<8x72xf32, #tpu.memory_space<vmem>>, %arg12: memref<8x1xf32, #tpu.memory_space<vmem>>, %arg13: memref<4x72xf32, #tpu.memory_space<vmem>>, %arg14: memref<4x1xf32, #tpu.memory_space<vmem>>, %arg15: memref<4x512xf32, #tpu.memory_space<vmem>>) attributes {dimension_semantics = [#tpu.dimension_semantics<arbitrary>], iteration_bounds = array<i64: 1>, scalar_prefetch = 0 : i64, scratch_operands = 0 : i64, tpu.core_type = #tpu.core_type<tc>, window_params = [{pipeline_mode = #tpu.pipeline_mode<synchronous>, transform_indices = @transform_0, window_bounds = array<i64: 12, 512>}, {pipeline_mode = #tpu.pipeline_mode<synchronous>, transform_indices = @transform_1, window_bounds = array<i64: 9, 512>}, {pipeline_mode = #tpu.pipeline_mode<synchronous>, transform_indices = @transform_2, window_bounds = array<i64: 4, 12>}, {pipeline_mode = #tpu.pipeline_mode<synchronous>, transform_indices = @transform_3, window_bounds = array<i64: 4, 1>}, {pipeline_mode = #tpu.pipeline_mode<synchronous>, transform_indices = @transform_4, window_bounds = array<i64: 4, 4>}, {pipeline_mode = #tpu.pipeline_mode<synchronous>, transform_indices = @transform_5, window_bounds = array<i64: 4, 1>}, {pipeline_mode = #tpu.pipeline_mode<synchronous>, transform_indices = @transform_6, window_bounds = array<i64: 3, 4>}, {pipeline_mode = #tpu.pipeline_mode<synchronous>, transform_indices = @transform_7, window_bounds = array<i64: 3, 1>}, {pipeline_mode = #tpu.pipeline_mode<synchronous>, transform_indices = @transform_8, window_bounds = array<i64: 8, 36>}, {pipeline_mode = #tpu.pipeline_mode<synchronous>, transform_indices = @transform_9, window_bounds = array<i64: 8, 1>}, {pipeline_mode = #tpu.pipeline_mode<synchronous>, transform_indices = @transform_10, window_bounds = array<i64: 8, 72>}, {pipeline_mode = #tpu.pipeline_mode<synchronous>, transform_indices = @transform_11, window_bounds = array<i64: 8, 1>}, {pipeline_mode = #tpu.pipeline_mode<synchronous>, transform_indices = @transform_12, window_bounds = array<i64: 4, 72>}, {pipeline_mode = #tpu.pipeline_mode<synchronous>, transform_indices = @transform_13, window_bounds = array<i64: 4, 1>}, {pipeline_mode = #tpu.pipeline_mode<synchronous>, transform_indices = @transform_14, window_bounds = array<i64: 4, 512>}]} {
    %c0 = arith.constant 0 : index
    %c0_0 = arith.constant 0 : index
    %0 = vector.load %arg1[%c0, %c0_0] : memref<12x512xf32, #tpu.memory_space<vmem>>, vector<12x512xf32>
    %1 = vector.extract_strided_slice %0 {offsets = [0, 0], sizes = [4, 512], strides = [1, 1]} : vector<12x512xf32> to vector<4x512xf32>
    %2 = vector.extract_strided_slice %0 {offsets = [4, 0], sizes = [4, 512], strides = [1, 1]} : vector<12x512xf32> to vector<4x512xf32>
    %3 = vector.extract_strided_slice %0 {offsets = [8, 0], sizes = [4, 512], strides = [1, 1]} : vector<12x512xf32> to vector<4x512xf32>
    %c0_1 = arith.constant 0 : index
    %c0_2 = arith.constant 0 : index
    %4 = vector.load %arg3[%c0_1, %c0_2] : memref<4x12xf32, #tpu.memory_space<vmem>>, vector<4x12xf32>
    %cst = arith.constant dense<0.000000e+00> : vector<4x512xf32>
    %5 = tpu.matmul %4, %0, %cst {dimension_numbers = #tpu.dot_dimension_numbers<[1], [0], [0], [1], [0, 0, 1, 1], [], []>} : vector<4x12xf32>, vector<12x512xf32>, vector<4x512xf32> -> vector<4x512xf32>
    %c0_3 = arith.constant 0 : index
    %c0_4 = arith.constant 0 : index
    %6 = vector.load %arg4[%c0_3, %c0_4] : memref<4x1xf32, #tpu.memory_space<vmem>>, vector<4x1xf32>
    %7 = vector.broadcast %6 : vector<4x1xf32> to vector<4x512xf32>
    %8 = arith.addf %5, %7 : vector<4x512xf32>
    %cst_5 = arith.constant 0.000000e+00 : f32
    %9 = vector.broadcast %cst_5 : f32 to vector<4x512xf32>
    %10 = arith.maximumf %8, %9 : vector<4x512xf32>
    %c0_6 = arith.constant 0 : index
    %c0_7 = arith.constant 0 : index
    %11 = vector.load %arg5[%c0_6, %c0_7] : memref<4x4xf32, #tpu.memory_space<vmem>>, vector<4x4xf32>
    %cst_8 = arith.constant dense<0.000000e+00> : vector<4x512xf32>
    %12 = tpu.matmul %11, %10, %cst_8 {dimension_numbers = #tpu.dot_dimension_numbers<[1], [0], [0], [1], [0, 0, 1, 1], [], []>} : vector<4x4xf32>, vector<4x512xf32>, vector<4x512xf32> -> vector<4x512xf32>
    %c0_9 = arith.constant 0 : index
    %c0_10 = arith.constant 0 : index
    %13 = vector.load %arg6[%c0_9, %c0_10] : memref<4x1xf32, #tpu.memory_space<vmem>>, vector<4x1xf32>
    %14 = vector.broadcast %13 : vector<4x1xf32> to vector<4x512xf32>
    %15 = arith.addf %12, %14 : vector<4x512xf32>
    %cst_11 = arith.constant 0.000000e+00 : f32
    %16 = vector.broadcast %cst_11 : f32 to vector<4x512xf32>
    %17 = arith.maximumf %15, %16 : vector<4x512xf32>
    %c0_12 = arith.constant 0 : index
    %c0_13 = arith.constant 0 : index
    %18 = vector.load %arg7[%c0_12, %c0_13] : memref<3x4xf32, #tpu.memory_space<vmem>>, vector<3x4xf32>
    %cst_14 = arith.constant dense<0.000000e+00> : vector<3x512xf32>
    %19 = tpu.matmul %18, %17, %cst_14 {dimension_numbers = #tpu.dot_dimension_numbers<[1], [0], [0], [1], [0, 0, 1, 1], [], []>} : vector<3x4xf32>, vector<4x512xf32>, vector<3x512xf32> -> vector<3x512xf32>
    %c0_15 = arith.constant 0 : index
    %c0_16 = arith.constant 0 : index
    %20 = vector.load %arg8[%c0_15, %c0_16] : memref<3x1xf32, #tpu.memory_space<vmem>>, vector<3x1xf32>
    %21 = vector.broadcast %20 : vector<3x1xf32> to vector<3x512xf32>
    %22 = arith.addf %19, %21 : vector<3x512xf32>
    %23 = arith.negf %22 : vector<3x512xf32>
    %24 = math.exp %23 : vector<3x512xf32>
    %cst_17 = arith.constant 1.000000e+00 : f32
    %25 = vector.broadcast %cst_17 : f32 to vector<3x512xf32>
    %26 = arith.addf %25, %24 : vector<3x512xf32>
    %27 = arith.divf %25, %26 : vector<3x512xf32>
    %28 = vector.extract_strided_slice %27 {offsets = [0, 0], sizes = [1, 512], strides = [1, 1]} : vector<3x512xf32> to vector<1x512xf32>
    %29 = vector.broadcast %28 : vector<1x512xf32> to vector<4x512xf32>
    %30 = arith.mulf %1, %29 : vector<4x512xf32>
    %31 = vector.extract_strided_slice %27 {offsets = [1, 0], sizes = [1, 512], strides = [1, 1]} : vector<3x512xf32> to vector<1x512xf32>
    %32 = vector.broadcast %31 : vector<1x512xf32> to vector<4x512xf32>
    %33 = arith.mulf %2, %32 : vector<4x512xf32>
    %34 = arith.addf %30, %33 : vector<4x512xf32>
    %35 = vector.extract_strided_slice %27 {offsets = [2, 0], sizes = [1, 512], strides = [1, 1]} : vector<3x512xf32> to vector<1x512xf32>
    %36 = vector.broadcast %35 : vector<1x512xf32> to vector<4x512xf32>
    %37 = arith.mulf %3, %36 : vector<4x512xf32>
    %38 = arith.addf %34, %37 : vector<4x512xf32>
    %c0_18 = arith.constant 0 : index
    %c0_19 = arith.constant 0 : index
    %39 = vector.load %arg2[%c0_18, %c0_19] : memref<9x512xf32, #tpu.memory_space<vmem>>, vector<9x512xf32>
    %40 = vector.extract_strided_slice %38 {offsets = [0, 495], sizes = [4, 17], strides = [1, 1]} : vector<4x512xf32> to vector<4x17xf32>
    %41 = vector.extract_strided_slice %38 {offsets = [0, 0], sizes = [4, 495], strides = [1, 1]} : vector<4x512xf32> to vector<4x495xf32>
    %42 = tpu.concatenate %40, %41 in 1 : vector<4x17xf32>, vector<4x495xf32> -> vector<4x512xf32>
    %43 = vector.extract_strided_slice %39 {offsets = [0, 0], sizes = [1, 512], strides = [1, 1]} : vector<9x512xf32> to vector<1x512xf32>
    %44 = vector.broadcast %43 : vector<1x512xf32> to vector<4x512xf32>
    %45 = arith.mulf %42, %44 : vector<4x512xf32>
    %46 = vector.extract_strided_slice %38 {offsets = [0, 496], sizes = [4, 16], strides = [1, 1]} : vector<4x512xf32> to vector<4x16xf32>
    %47 = vector.extract_strided_slice %38 {offsets = [0, 0], sizes = [4, 496], strides = [1, 1]} : vector<4x512xf32> to vector<4x496xf32>
    %48 = tpu.concatenate %46, %47 in 1 : vector<4x16xf32>, vector<4x496xf32> -> vector<4x512xf32>
    %49 = vector.extract_strided_slice %39 {offsets = [1, 0], sizes = [1, 512], strides = [1, 1]} : vector<9x512xf32> to vector<1x512xf32>
    %50 = vector.broadcast %49 : vector<1x512xf32> to vector<4x512xf32>
    %51 = arith.mulf %48, %50 : vector<4x512xf32>
    %52 = vector.extract_strided_slice %38 {offsets = [0, 497], sizes = [4, 15], strides = [1, 1]} : vector<4x512xf32> to vector<4x15xf32>
    %53 = vector.extract_strided_slice %38 {offsets = [0, 0], sizes = [4, 497], strides = [1, 1]} : vector<4x512xf32> to vector<4x497xf32>
    %54 = tpu.concatenate %52, %53 in 1 : vector<4x15xf32>, vector<4x497xf32> -> vector<4x512xf32>
    %55 = vector.extract_strided_slice %39 {offsets = [2, 0], sizes = [1, 512], strides = [1, 1]} : vector<9x512xf32> to vector<1x512xf32>
    %56 = vector.broadcast %55 : vector<1x512xf32> to vector<4x512xf32>
    %57 = arith.mulf %54, %56 : vector<4x512xf32>
    %58 = vector.extract_strided_slice %38 {offsets = [0, 511], sizes = [4, 1], strides = [1, 1]} : vector<4x512xf32> to vector<4x1xf32>
    %59 = vector.extract_strided_slice %38 {offsets = [0, 0], sizes = [4, 511], strides = [1, 1]} : vector<4x512xf32> to vector<4x511xf32>
    %60 = tpu.concatenate %58, %59 in 1 : vector<4x1xf32>, vector<4x511xf32> -> vector<4x512xf32>
    %61 = vector.extract_strided_slice %39 {offsets = [3, 0], sizes = [1, 512], strides = [1, 1]} : vector<9x512xf32> to vector<1x512xf32>
    %62 = vector.broadcast %61 : vector<1x512xf32> to vector<4x512xf32>
    %63 = arith.mulf %60, %62 : vector<4x512xf32>
    %64 = vector.extract_strided_slice %39 {offsets = [4, 0], sizes = [1, 512], strides = [1, 1]} : vector<9x512xf32> to vector<1x512xf32>
    %65 = vector.broadcast %64 : vector<1x512xf32> to vector<4x512xf32>
    %66 = arith.mulf %38, %65 : vector<4x512xf32>
    %67 = vector.extract_strided_slice %38 {offsets = [0, 1], sizes = [4, 511], strides = [1, 1]} : vector<4x512xf32> to vector<4x511xf32>
    %68 = vector.extract_strided_slice %38 {offsets = [0, 0], sizes = [4, 1], strides = [1, 1]} : vector<4x512xf32> to vector<4x1xf32>
    %69 = tpu.concatenate %67, %68 in 1 : vector<4x511xf32>, vector<4x1xf32> -> vector<4x512xf32>
    %70 = vector.extract_strided_slice %39 {offsets = [5, 0], sizes = [1, 512], strides = [1, 1]} : vector<9x512xf32> to vector<1x512xf32>
    %71 = vector.broadcast %70 : vector<1x512xf32> to vector<4x512xf32>
    %72 = arith.mulf %69, %71 : vector<4x512xf32>
    %73 = vector.extract_strided_slice %38 {offsets = [0, 15], sizes = [4, 497], strides = [1, 1]} : vector<4x512xf32> to vector<4x497xf32>
    %74 = vector.extract_strided_slice %38 {offsets = [0, 0], sizes = [4, 15], strides = [1, 1]} : vector<4x512xf32> to vector<4x15xf32>
    %75 = tpu.concatenate %73, %74 in 1 : vector<4x497xf32>, vector<4x15xf32> -> vector<4x512xf32>
    %76 = vector.extract_strided_slice %39 {offsets = [6, 0], sizes = [1, 512], strides = [1, 1]} : vector<9x512xf32> to vector<1x512xf32>
    %77 = vector.broadcast %76 : vector<1x512xf32> to vector<4x512xf32>
    %78 = arith.mulf %75, %77 : vector<4x512xf32>
    %79 = vector.extract_strided_slice %38 {offsets = [0, 16], sizes = [4, 496], strides = [1, 1]} : vector<4x512xf32> to vector<4x496xf32>
    %80 = vector.extract_strided_slice %38 {offsets = [0, 0], sizes = [4, 16], strides = [1, 1]} : vector<4x512xf32> to vector<4x16xf32>
    %81 = tpu.concatenate %79, %80 in 1 : vector<4x496xf32>, vector<4x16xf32> -> vector<4x512xf32>
    %82 = vector.extract_strided_slice %39 {offsets = [7, 0], sizes = [1, 512], strides = [1, 1]} : vector<9x512xf32> to vector<1x512xf32>
    %83 = vector.broadcast %82 : vector<1x512xf32> to vector<4x512xf32>
    %84 = arith.mulf %81, %83 : vector<4x512xf32>
    %85 = vector.extract_strided_slice %38 {offsets = [0, 17], sizes = [4, 495], strides = [1, 1]} : vector<4x512xf32> to vector<4x495xf32>
    %86 = vector.extract_strided_slice %38 {offsets = [0, 0], sizes = [4, 17], strides = [1, 1]} : vector<4x512xf32> to vector<4x17xf32>
    %87 = tpu.concatenate %85, %86 in 1 : vector<4x495xf32>, vector<4x17xf32> -> vector<4x512xf32>
    %88 = vector.extract_strided_slice %39 {offsets = [8, 0], sizes = [1, 512], strides = [1, 1]} : vector<9x512xf32> to vector<1x512xf32>
    %89 = vector.broadcast %88 : vector<1x512xf32> to vector<4x512xf32>
    %90 = arith.mulf %87, %89 : vector<4x512xf32>
    %91 = tpu.concatenate %45, %51, %57, %63, %66, %72, %78, %84, %90 in 0 : vector<4x512xf32>, vector<4x512xf32>, vector<4x512xf32>, vector<4x512xf32>, vector<4x512xf32>, vector<4x512xf32>, vector<4x512xf32>, vector<4x512xf32>, vector<4x512xf32> -> vector<36x512xf32>
    %c0_20 = arith.constant 0 : index
    %c0_21 = arith.constant 0 : index
    %92 = vector.load %arg9[%c0_20, %c0_21] : memref<8x36xf32, #tpu.memory_space<vmem>>, vector<8x36xf32>
    %cst_22 = arith.constant dense<0.000000e+00> : vector<8x512xf32>
    %93 = tpu.matmul %92, %91, %cst_22 {dimension_numbers = #tpu.dot_dimension_numbers<[1], [0], [0], [1], [0, 0, 1, 1], [], []>} : vector<8x36xf32>, vector<36x512xf32>, vector<8x512xf32> -> vector<8x512xf32>
    %c0_23 = arith.constant 0 : index
    %c0_24 = arith.constant 0 : index
    %94 = vector.load %arg10[%c0_23, %c0_24] : memref<8x1xf32, #tpu.memory_space<vmem>>, vector<8x1xf32>
    %95 = vector.broadcast %94 : vector<8x1xf32> to vector<8x512xf32>
    %96 = arith.addf %93, %95 : vector<8x512xf32>
    %cst_25 = arith.constant 0.000000e+00 : f32
    %97 = vector.broadcast %cst_25 : f32 to vector<8x512xf32>
    %98 = arith.maximumf %96, %97 : vector<8x512xf32>
    %99 = vector.extract_strided_slice %98 {offsets = [0, 495], sizes = [8, 17], strides = [1, 1]} : vector<8x512xf32> to vector<8x17xf32>
    %100 = vector.extract_strided_slice %98 {offsets = [0, 0], sizes = [8, 495], strides = [1, 1]} : vector<8x512xf32> to vector<8x495xf32>
    %101 = tpu.concatenate %99, %100 in 1 : vector<8x17xf32>, vector<8x495xf32> -> vector<8x512xf32>
    %102 = vector.extract_strided_slice %39 {offsets = [0, 0], sizes = [1, 512], strides = [1, 1]} : vector<9x512xf32> to vector<1x512xf32>
    %103 = vector.broadcast %102 : vector<1x512xf32> to vector<8x512xf32>
    %104 = arith.mulf %101, %103 : vector<8x512xf32>
    %105 = vector.extract_strided_slice %98 {offsets = [0, 496], sizes = [8, 16], strides = [1, 1]} : vector<8x512xf32> to vector<8x16xf32>
    %106 = vector.extract_strided_slice %98 {offsets = [0, 0], sizes = [8, 496], strides = [1, 1]} : vector<8x512xf32> to vector<8x496xf32>
    %107 = tpu.concatenate %105, %106 in 1 : vector<8x16xf32>, vector<8x496xf32> -> vector<8x512xf32>
    %108 = vector.extract_strided_slice %39 {offsets = [1, 0], sizes = [1, 512], strides = [1, 1]} : vector<9x512xf32> to vector<1x512xf32>
    %109 = vector.broadcast %108 : vector<1x512xf32> to vector<8x512xf32>
    %110 = arith.mulf %107, %109 : vector<8x512xf32>
    %111 = vector.extract_strided_slice %98 {offsets = [0, 497], sizes = [8, 15], strides = [1, 1]} : vector<8x512xf32> to vector<8x15xf32>
    %112 = vector.extract_strided_slice %98 {offsets = [0, 0], sizes = [8, 497], strides = [1, 1]} : vector<8x512xf32> to vector<8x497xf32>
    %113 = tpu.concatenate %111, %112 in 1 : vector<8x15xf32>, vector<8x497xf32> -> vector<8x512xf32>
    %114 = vector.extract_strided_slice %39 {offsets = [2, 0], sizes = [1, 512], strides = [1, 1]} : vector<9x512xf32> to vector<1x512xf32>
    %115 = vector.broadcast %114 : vector<1x512xf32> to vector<8x512xf32>
    %116 = arith.mulf %113, %115 : vector<8x512xf32>
    %117 = vector.extract_strided_slice %98 {offsets = [0, 511], sizes = [8, 1], strides = [1, 1]} : vector<8x512xf32> to vector<8x1xf32>
    %118 = vector.extract_strided_slice %98 {offsets = [0, 0], sizes = [8, 511], strides = [1, 1]} : vector<8x512xf32> to vector<8x511xf32>
    %119 = tpu.concatenate %117, %118 in 1 : vector<8x1xf32>, vector<8x511xf32> -> vector<8x512xf32>
    %120 = vector.extract_strided_slice %39 {offsets = [3, 0], sizes = [1, 512], strides = [1, 1]} : vector<9x512xf32> to vector<1x512xf32>
    %121 = vector.broadcast %120 : vector<1x512xf32> to vector<8x512xf32>
    %122 = arith.mulf %119, %121 : vector<8x512xf32>
    %123 = vector.extract_strided_slice %39 {offsets = [4, 0], sizes = [1, 512], strides = [1, 1]} : vector<9x512xf32> to vector<1x512xf32>
    %124 = vector.broadcast %123 : vector<1x512xf32> to vector<8x512xf32>
    %125 = arith.mulf %98, %124 : vector<8x512xf32>
    %126 = vector.extract_strided_slice %98 {offsets = [0, 1], sizes = [8, 511], strides = [1, 1]} : vector<8x512xf32> to vector<8x511xf32>
    %127 = vector.extract_strided_slice %98 {offsets = [0, 0], sizes = [8, 1], strides = [1, 1]} : vector<8x512xf32> to vector<8x1xf32>
    %128 = tpu.concatenate %126, %127 in 1 : vector<8x511xf32>, vector<8x1xf32> -> vector<8x512xf32>
    %129 = vector.extract_strided_slice %39 {offsets = [5, 0], sizes = [1, 512], strides = [1, 1]} : vector<9x512xf32> to vector<1x512xf32>
    %130 = vector.broadcast %129 : vector<1x512xf32> to vector<8x512xf32>
    %131 = arith.mulf %128, %130 : vector<8x512xf32>
    %132 = vector.extract_strided_slice %98 {offsets = [0, 15], sizes = [8, 497], strides = [1, 1]} : vector<8x512xf32> to vector<8x497xf32>
    %133 = vector.extract_strided_slice %98 {offsets = [0, 0], sizes = [8, 15], strides = [1, 1]} : vector<8x512xf32> to vector<8x15xf32>
    %134 = tpu.concatenate %132, %133 in 1 : vector<8x497xf32>, vector<8x15xf32> -> vector<8x512xf32>
    %135 = vector.extract_strided_slice %39 {offsets = [6, 0], sizes = [1, 512], strides = [1, 1]} : vector<9x512xf32> to vector<1x512xf32>
    %136 = vector.broadcast %135 : vector<1x512xf32> to vector<8x512xf32>
    %137 = arith.mulf %134, %136 : vector<8x512xf32>
    %138 = vector.extract_strided_slice %98 {offsets = [0, 16], sizes = [8, 496], strides = [1, 1]} : vector<8x512xf32> to vector<8x496xf32>
    %139 = vector.extract_strided_slice %98 {offsets = [0, 0], sizes = [8, 16], strides = [1, 1]} : vector<8x512xf32> to vector<8x16xf32>
    %140 = tpu.concatenate %138, %139 in 1 : vector<8x496xf32>, vector<8x16xf32> -> vector<8x512xf32>
    %141 = vector.extract_strided_slice %39 {offsets = [7, 0], sizes = [1, 512], strides = [1, 1]} : vector<9x512xf32> to vector<1x512xf32>
    %142 = vector.broadcast %141 : vector<1x512xf32> to vector<8x512xf32>
    %143 = arith.mulf %140, %142 : vector<8x512xf32>
    %144 = vector.extract_strided_slice %98 {offsets = [0, 17], sizes = [8, 495], strides = [1, 1]} : vector<8x512xf32> to vector<8x495xf32>
    %145 = vector.extract_strided_slice %98 {offsets = [0, 0], sizes = [8, 17], strides = [1, 1]} : vector<8x512xf32> to vector<8x17xf32>
    %146 = tpu.concatenate %144, %145 in 1 : vector<8x495xf32>, vector<8x17xf32> -> vector<8x512xf32>
    %147 = vector.extract_strided_slice %39 {offsets = [8, 0], sizes = [1, 512], strides = [1, 1]} : vector<9x512xf32> to vector<1x512xf32>
    %148 = vector.broadcast %147 : vector<1x512xf32> to vector<8x512xf32>
    %149 = arith.mulf %146, %148 : vector<8x512xf32>
    %150 = tpu.concatenate %104, %110, %116, %122, %125, %131, %137, %143, %149 in 0 : vector<8x512xf32>, vector<8x512xf32>, vector<8x512xf32>, vector<8x512xf32>, vector<8x512xf32>, vector<8x512xf32>, vector<8x512xf32>, vector<8x512xf32>, vector<8x512xf32> -> vector<72x512xf32>
    %c0_26 = arith.constant 0 : index
    %c0_27 = arith.constant 0 : index
    %151 = vector.load %arg11[%c0_26, %c0_27] : memref<8x72xf32, #tpu.memory_space<vmem>>, vector<8x72xf32>
    %cst_28 = arith.constant dense<0.000000e+00> : vector<8x512xf32>
    %152 = tpu.matmul %151, %150, %cst_28 {dimension_numbers = #tpu.dot_dimension_numbers<[1], [0], [0], [1], [0, 0, 1, 1], [], []>} : vector<8x72xf32>, vector<72x512xf32>, vector<8x512xf32> -> vector<8x512xf32>
    %c0_29 = arith.constant 0 : index
    %c0_30 = arith.constant 0 : index
    %153 = vector.load %arg12[%c0_29, %c0_30] : memref<8x1xf32, #tpu.memory_space<vmem>>, vector<8x1xf32>
    %154 = vector.broadcast %153 : vector<8x1xf32> to vector<8x512xf32>
    %155 = arith.addf %152, %154 : vector<8x512xf32>
    %cst_31 = arith.constant 0.000000e+00 : f32
    %156 = vector.broadcast %cst_31 : f32 to vector<8x512xf32>
    %157 = arith.maximumf %155, %156 : vector<8x512xf32>
    %158 = vector.extract_strided_slice %157 {offsets = [0, 495], sizes = [8, 17], strides = [1, 1]} : vector<8x512xf32> to vector<8x17xf32>
    %159 = vector.extract_strided_slice %157 {offsets = [0, 0], sizes = [8, 495], strides = [1, 1]} : vector<8x512xf32> to vector<8x495xf32>
    %160 = tpu.concatenate %158, %159 in 1 : vector<8x17xf32>, vector<8x495xf32> -> vector<8x512xf32>
    %161 = vector.extract_strided_slice %39 {offsets = [0, 0], sizes = [1, 512], strides = [1, 1]} : vector<9x512xf32> to vector<1x512xf32>
    %162 = vector.broadcast %161 : vector<1x512xf32> to vector<8x512xf32>
    %163 = arith.mulf %160, %162 : vector<8x512xf32>
    %164 = vector.extract_strided_slice %157 {offsets = [0, 496], sizes = [8, 16], strides = [1, 1]} : vector<8x512xf32> to vector<8x16xf32>
    %165 = vector.extract_strided_slice %157 {offsets = [0, 0], sizes = [8, 496], strides = [1, 1]} : vector<8x512xf32> to vector<8x496xf32>
    %166 = tpu.concatenate %164, %165 in 1 : vector<8x16xf32>, vector<8x496xf32> -> vector<8x512xf32>
    %167 = vector.extract_strided_slice %39 {offsets = [1, 0], sizes = [1, 512], strides = [1, 1]} : vector<9x512xf32> to vector<1x512xf32>
    %168 = vector.broadcast %167 : vector<1x512xf32> to vector<8x512xf32>
    %169 = arith.mulf %166, %168 : vector<8x512xf32>
    %170 = vector.extract_strided_slice %157 {offsets = [0, 497], sizes = [8, 15], strides = [1, 1]} : vector<8x512xf32> to vector<8x15xf32>
    %171 = vector.extract_strided_slice %157 {offsets = [0, 0], sizes = [8, 497], strides = [1, 1]} : vector<8x512xf32> to vector<8x497xf32>
    %172 = tpu.concatenate %170, %171 in 1 : vector<8x15xf32>, vector<8x497xf32> -> vector<8x512xf32>
    %173 = vector.extract_strided_slice %39 {offsets = [2, 0], sizes = [1, 512], strides = [1, 1]} : vector<9x512xf32> to vector<1x512xf32>
    %174 = vector.broadcast %173 : vector<1x512xf32> to vector<8x512xf32>
    %175 = arith.mulf %172, %174 : vector<8x512xf32>
    %176 = vector.extract_strided_slice %157 {offsets = [0, 511], sizes = [8, 1], strides = [1, 1]} : vector<8x512xf32> to vector<8x1xf32>
    %177 = vector.extract_strided_slice %157 {offsets = [0, 0], sizes = [8, 511], strides = [1, 1]} : vector<8x512xf32> to vector<8x511xf32>
    %178 = tpu.concatenate %176, %177 in 1 : vector<8x1xf32>, vector<8x511xf32> -> vector<8x512xf32>
    %179 = vector.extract_strided_slice %39 {offsets = [3, 0], sizes = [1, 512], strides = [1, 1]} : vector<9x512xf32> to vector<1x512xf32>
    %180 = vector.broadcast %179 : vector<1x512xf32> to vector<8x512xf32>
    %181 = arith.mulf %178, %180 : vector<8x512xf32>
    %182 = vector.extract_strided_slice %39 {offsets = [4, 0], sizes = [1, 512], strides = [1, 1]} : vector<9x512xf32> to vector<1x512xf32>
    %183 = vector.broadcast %182 : vector<1x512xf32> to vector<8x512xf32>
    %184 = arith.mulf %157, %183 : vector<8x512xf32>
    %185 = vector.extract_strided_slice %157 {offsets = [0, 1], sizes = [8, 511], strides = [1, 1]} : vector<8x512xf32> to vector<8x511xf32>
    %186 = vector.extract_strided_slice %157 {offsets = [0, 0], sizes = [8, 1], strides = [1, 1]} : vector<8x512xf32> to vector<8x1xf32>
    %187 = tpu.concatenate %185, %186 in 1 : vector<8x511xf32>, vector<8x1xf32> -> vector<8x512xf32>
    %188 = vector.extract_strided_slice %39 {offsets = [5, 0], sizes = [1, 512], strides = [1, 1]} : vector<9x512xf32> to vector<1x512xf32>
    %189 = vector.broadcast %188 : vector<1x512xf32> to vector<8x512xf32>
    %190 = arith.mulf %187, %189 : vector<8x512xf32>
    %191 = vector.extract_strided_slice %157 {offsets = [0, 15], sizes = [8, 497], strides = [1, 1]} : vector<8x512xf32> to vector<8x497xf32>
    %192 = vector.extract_strided_slice %157 {offsets = [0, 0], sizes = [8, 15], strides = [1, 1]} : vector<8x512xf32> to vector<8x15xf32>
    %193 = tpu.concatenate %191, %192 in 1 : vector<8x497xf32>, vector<8x15xf32> -> vector<8x512xf32>
    %194 = vector.extract_strided_slice %39 {offsets = [6, 0], sizes = [1, 512], strides = [1, 1]} : vector<9x512xf32> to vector<1x512xf32>
    %195 = vector.broadcast %194 : vector<1x512xf32> to vector<8x512xf32>
    %196 = arith.mulf %193, %195 : vector<8x512xf32>
    %197 = vector.extract_strided_slice %157 {offsets = [0, 16], sizes = [8, 496], strides = [1, 1]} : vector<8x512xf32> to vector<8x496xf32>
    %198 = vector.extract_strided_slice %157 {offsets = [0, 0], sizes = [8, 16], strides = [1, 1]} : vector<8x512xf32> to vector<8x16xf32>
    %199 = tpu.concatenate %197, %198 in 1 : vector<8x496xf32>, vector<8x16xf32> -> vector<8x512xf32>
    %200 = vector.extract_strided_slice %39 {offsets = [7, 0], sizes = [1, 512], strides = [1, 1]} : vector<9x512xf32> to vector<1x512xf32>
    %201 = vector.broadcast %200 : vector<1x512xf32> to vector<8x512xf32>
    %202 = arith.mulf %199, %201 : vector<8x512xf32>
    %203 = vector.extract_strided_slice %157 {offsets = [0, 17], sizes = [8, 495], strides = [1, 1]} : vector<8x512xf32> to vector<8x495xf32>
    %204 = vector.extract_strided_slice %157 {offsets = [0, 0], sizes = [8, 17], strides = [1, 1]} : vector<8x512xf32> to vector<8x17xf32>
    %205 = tpu.concatenate %203, %204 in 1 : vector<8x495xf32>, vector<8x17xf32> -> vector<8x512xf32>
    %206 = vector.extract_strided_slice %39 {offsets = [8, 0], sizes = [1, 512], strides = [1, 1]} : vector<9x512xf32> to vector<1x512xf32>
    %207 = vector.broadcast %206 : vector<1x512xf32> to vector<8x512xf32>
    %208 = arith.mulf %205, %207 : vector<8x512xf32>
    %209 = tpu.concatenate %163, %169, %175, %181, %184, %190, %196, %202, %208 in 0 : vector<8x512xf32>, vector<8x512xf32>, vector<8x512xf32>, vector<8x512xf32>, vector<8x512xf32>, vector<8x512xf32>, vector<8x512xf32>, vector<8x512xf32>, vector<8x512xf32> -> vector<72x512xf32>
    %c0_32 = arith.constant 0 : index
    %c0_33 = arith.constant 0 : index
    %210 = vector.load %arg13[%c0_32, %c0_33] : memref<4x72xf32, #tpu.memory_space<vmem>>, vector<4x72xf32>
    %cst_34 = arith.constant dense<0.000000e+00> : vector<4x512xf32>
    %211 = tpu.matmul %210, %209, %cst_34 {dimension_numbers = #tpu.dot_dimension_numbers<[1], [0], [0], [1], [0, 0, 1, 1], [], []>} : vector<4x72xf32>, vector<72x512xf32>, vector<4x512xf32> -> vector<4x512xf32>
    %c0_35 = arith.constant 0 : index
    %c0_36 = arith.constant 0 : index
    %212 = vector.load %arg14[%c0_35, %c0_36] : memref<4x1xf32, #tpu.memory_space<vmem>>, vector<4x1xf32>
    %213 = vector.broadcast %212 : vector<4x1xf32> to vector<4x512xf32>
    %214 = arith.addf %211, %213 : vector<4x512xf32>
    %cst_37 = arith.constant 0.000000e+00 : f32
    %215 = vector.broadcast %cst_37 : f32 to vector<4x512xf32>
    %216 = arith.maximumf %214, %215 : vector<4x512xf32>
    %c0_38 = arith.constant 0 : index
    %c0_39 = arith.constant 0 : index
    %217 = vector.load %arg15[%c0_38, %c0_39] : memref<4x512xf32, #tpu.memory_space<vmem>>, vector<4x512xf32>
    tpu.vector_store %arg15[%c0_38, %c0_39], %216 {strides = array<i32>} : memref<4x512xf32, #tpu.memory_space<vmem>>, vector<4x512xf32>,
    return
  }
  func.func @transform_0(%arg0: i32) -> (i32, i32) {
    %c0_i32 = arith.constant 0 : i32
    %c0_i32_0 = arith.constant 0 : i32
    %c0_i32_1 = arith.constant 0 : i32
    return %c0_i32, %c0_i32_0 : i32, i32
  }
  func.func @transform_1(%arg0: i32) -> (i32, i32) {
    %c0_i32 = arith.constant 0 : i32
    %c0_i32_0 = arith.constant 0 : i32
    %c0_i32_1 = arith.constant 0 : i32
    return %c0_i32, %c0_i32_0 : i32, i32
  }
  func.func @transform_2(%arg0: i32) -> (i32, i32) {
    %c0_i32 = arith.constant 0 : i32
    %c0_i32_0 = arith.constant 0 : i32
    %c0_i32_1 = arith.constant 0 : i32
    return %c0_i32, %c0_i32_0 : i32, i32
  }
  func.func @transform_3(%arg0: i32) -> (i32, i32) {
    %c0_i32 = arith.constant 0 : i32
    %c0_i32_0 = arith.constant 0 : i32
    %c0_i32_1 = arith.constant 0 : i32
    return %c0_i32, %c0_i32_0 : i32, i32
  }
  func.func @transform_4(%arg0: i32) -> (i32, i32) {
    %c0_i32 = arith.constant 0 : i32
    %c0_i32_0 = arith.constant 0 : i32
    %c0_i32_1 = arith.constant 0 : i32
    return %c0_i32, %c0_i32_0 : i32, i32
  }
  func.func @transform_5(%arg0: i32) -> (i32, i32) {
    %c0_i32 = arith.constant 0 : i32
    %c0_i32_0 = arith.constant 0 : i32
    %c0_i32_1 = arith.constant 0 : i32
    return %c0_i32, %c0_i32_0 : i32, i32
  }
  func.func @transform_6(%arg0: i32) -> (i32, i32) {
    %c0_i32 = arith.constant 0 : i32
    %c0_i32_0 = arith.constant 0 : i32
    %c0_i32_1 = arith.constant 0 : i32
    return %c0_i32, %c0_i32_0 : i32, i32
  }
  func.func @transform_7(%arg0: i32) -> (i32, i32) {
    %c0_i32 = arith.constant 0 : i32
    %c0_i32_0 = arith.constant 0 : i32
    %c0_i32_1 = arith.constant 0 : i32
    return %c0_i32, %c0_i32_0 : i32, i32
  }
  func.func @transform_8(%arg0: i32) -> (i32, i32) {
    %c0_i32 = arith.constant 0 : i32
    %c0_i32_0 = arith.constant 0 : i32
    %c0_i32_1 = arith.constant 0 : i32
    return %c0_i32, %c0_i32_0 : i32, i32
  }
  func.func @transform_9(%arg0: i32) -> (i32, i32) {
    %c0_i32 = arith.constant 0 : i32
    %c0_i32_0 = arith.constant 0 : i32
    %c0_i32_1 = arith.constant 0 : i32
    return %c0_i32, %c0_i32_0 : i32, i32
  }
  func.func @transform_10(%arg0: i32) -> (i32, i32) {
    %c0_i32 = arith.constant 0 : i32
    %c0_i32_0 = arith.constant 0 : i32
    %c0_i32_1 = arith.constant 0 : i32
    return %c0_i32, %c0_i32_0 : i32, i32
  }
  func.func @transform_11(%arg0: i32) -> (i32, i32) {
    %c0_i32 = arith.constant 0 : i32
    %c0_i32_0 = arith.constant 0 : i32
    %c0_i32_1 = arith.constant 0 : i32
    return %c0_i32, %c0_i32_0 : i32, i32
  }
  func.func @transform_12(%arg0: i32) -> (i32, i32) {
    %c0_i32 = arith.constant 0 : i32
    %c0_i32_0 = arith.constant 0 : i32
    %c0_i32_1 = arith.constant 0 : i32
    return %c0_i32, %c0_i32_0 : i32, i32
  }
  func.func @transform_13(%arg0: i32) -> (i32, i32) {
    %c0_i32 = arith.constant 0 : i32
    %c0_i32_0 = arith.constant 0 : i32
    %c0_i32_1 = arith.constant 0 : i32
    return %c0_i32, %c0_i32_0 : i32, i32
  }
  func.func @transform_14(%arg0: i32) -> (i32, i32) {
    %c0_i32 = arith.constant 0 : i32
    %c0_i32_0 = arith.constant 0 : i32
    %c0_i32_1 = arith.constant 0 : i32
    return %c0_i32, %c0_i32_0 : i32, i32
  }
}

</mosaic_0001>

<llo_original>
// kernel: _atten_forward_impl.1
$region0: #{_atten_forward_impl.1}
  #allocation0 [shape = 'u32[]', space=smem, size = 0x4, offset = 0x4, fixed_abs, tag = 'smem constant byte address 0x4 - core index']
  #allocation1 [shape = 'u32[72,128]{1,0:T(1,128)}', space=vmem, size = 0x9000, scoped, tag = 'internal scratch']
  %s0 = inlined_call_operand.vmem [shape: f32[12,512], index: 0, kind: input, shape index: {}]
  %s1 = inlined_call_operand.vmem [shape: f32[9,512], index: 1, kind: input, shape index: {}]
  %s2 = inlined_call_operand.vmem [shape: f32[4,12], index: 2, kind: input, shape index: {}]
  %s3 = inlined_call_operand.vmem [shape: f32[4,1], index: 3, kind: input, shape index: {}]
  %s4 = inlined_call_operand.vmem [shape: f32[4,4], index: 4, kind: input, shape index: {}]
  %s5 = inlined_call_operand.vmem [shape: f32[4,1], index: 5, kind: input, shape index: {}]
  %s6 = inlined_call_operand.vmem [shape: f32[3,4], index: 6, kind: input, shape index: {}]
  %s7 = inlined_call_operand.vmem [shape: f32[3,1], index: 7, kind: input, shape index: {}]
  %s8 = inlined_call_operand.vmem [shape: f32[8,36], index: 8, kind: input, shape index: {}]
  %s9 = inlined_call_operand.vmem [shape: f32[8,1], index: 9, kind: input, shape index: {}]
  %s10 = inlined_call_operand.vmem [shape: f32[8,72], index: 10, kind: input, shape index: {}]
  %s11 = inlined_call_operand.vmem [shape: f32[8,1], index: 11, kind: input, shape index: {}]
  %s12 = inlined_call_operand.vmem [shape: f32[4,72], index: 12, kind: input, shape index: {}]
  %s13 = inlined_call_operand.vmem [shape: f32[4,1], index: 13, kind: input, shape index: {}]
  %s14 = inlined_call_operand.vmem [shape: f32[4,512], index: 14, kind: output, shape index: {}]
  %s15 = sld [smem:[#allocation0]]
  $region66: #{_atten_forward_impl.1} parent=0
    _
  %s17 = ssub.s32 1, %s15
  %s18 = scalar_select 0, %s17, %s15
  // Predicated region
  $region2: #{_atten_forward_impl.1} parent=0 // pred_check
    _
  $region3: #{_atten_forward_impl.1} parent=0 // pred_check_branch
    %20 = sbr.rel (0) target = $region5
  $region4: #{_atten_forward_impl.1} parent=0 // pred_region
    _
  $region5: #{_atten_forward_impl.1} parent=0 // pred_fallthru
    _
  // Predicated region
  $region6: #{_atten_forward_impl.1} parent=0 // pred_check
    _
  $region7: #{_atten_forward_impl.1} parent=0 // pred_check_branch
    %22 = sbr.rel (0) target = $region9
  $region8: #{_atten_forward_impl.1} parent=0 // pred_region
    _
  $region9: #{_atten_forward_impl.1} parent=0 // pred_fallthru
    _
  // Predicated region
  $region10: #{_atten_forward_impl.1} parent=0 // pred_check
    _
  $region11: #{_atten_forward_impl.1} parent=0 // pred_check_branch
    %24 = sbr.rel (0) target = $region13
  $region12: #{_atten_forward_impl.1} parent=0 // pred_region
    _
  $region13: #{_atten_forward_impl.1} parent=0 // pred_fallthru
    _
  // Predicated region
  $region14: #{_atten_forward_impl.1} parent=0 // pred_check
    _
  $region15: #{_atten_forward_impl.1} parent=0 // pred_check_branch
    %26 = sbr.rel (0) target = $region17
  $region16: #{_atten_forward_impl.1} parent=0 // pred_region
    _
  $region17: #{_atten_forward_impl.1} parent=0 // pred_fallthru
    _
  // Predicated region
  $region18: #{_atten_forward_impl.1} parent=0 // pred_check
    _
  $region19: #{_atten_forward_impl.1} parent=0 // pred_check_branch
    %28 = sbr.rel (0) target = $region21
  $region20: #{_atten_forward_impl.1} parent=0 // pred_region
    _
  $region21: #{_atten_forward_impl.1} parent=0 // pred_fallthru
    _
  // Predicated region
  $region22: #{_atten_forward_impl.1} parent=0 // pred_check
    _
  $region23: #{_atten_forward_impl.1} parent=0 // pred_check_branch
    %30 = sbr.rel (0) target = $region25
  $region24: #{_atten_forward_impl.1} parent=0 // pred_region
    _
  $region25: #{_atten_forward_impl.1} parent=0 // pred_fallthru
    _
  // Predicated region
  $region26: #{_atten_forward_impl.1} parent=0 // pred_check
    _
  $region27: #{_atten_forward_impl.1} parent=0 // pred_check_branch
    %32 = sbr.rel (0) target = $region29
  $region28: #{_atten_forward_impl.1} parent=0 // pred_region
    _
  $region29: #{_atten_forward_impl.1} parent=0 // pred_fallthru
    _
  // Predicated region
  $region30: #{_atten_forward_impl.1} parent=0 // pred_check
    _
  $region31: #{_atten_forward_impl.1} parent=0 // pred_check_branch
    %34 = sbr.rel (0) target = $region33
  $region32: #{_atten_forward_impl.1} parent=0 // pred_region
    _
  $region33: #{_atten_forward_impl.1} parent=0 // pred_fallthru
    _
  // Predicated region
  $region34: #{_atten_forward_impl.1} parent=0 // pred_check
    _
  $region35: #{_atten_forward_impl.1} parent=0 // pred_check_branch
    %36 = sbr.rel (0) target = $region37
  $region36: #{_atten_forward_impl.1} parent=0 // pred_region
    _
  $region37: #{_atten_forward_impl.1} parent=0 // pred_fallthru
    _
  // Predicated region
  $region38: #{_atten_forward_impl.1} parent=0 // pred_check
    _
  $region39: #{_atten_forward_impl.1} parent=0 // pred_check_branch
    %38 = sbr.rel (0) target = $region41
  $region40: #{_atten_forward_impl.1} parent=0 // pred_region
    _
  $region41: #{_atten_forward_impl.1} parent=0 // pred_fallthru
    _
  // Predicated region
  $region42: #{_atten_forward_impl.1} parent=0 // pred_check
    _
  $region43: #{_atten_forward_impl.1} parent=0 // pred_check_branch
    %40 = sbr.rel (0) target = $region45
  $region44: #{_atten_forward_impl.1} parent=0 // pred_region
    _
  $region45: #{_atten_forward_impl.1} parent=0 // pred_fallthru
    _
  // Predicated region
  $region46: #{_atten_forward_impl.1} parent=0 // pred_check
    _
  $region47: #{_atten_forward_impl.1} parent=0 // pred_check_branch
    %42 = sbr.rel (0) target = $region49
  $region48: #{_atten_forward_impl.1} parent=0 // pred_region
    _
  $region49: #{_atten_forward_impl.1} parent=0 // pred_fallthru
    _
  // Predicated region
  $region50: #{_atten_forward_impl.1} parent=0 // pred_check
    _
  $region51: #{_atten_forward_impl.1} parent=0 // pred_check_branch
    %44 = sbr.rel (0) target = $region53
  $region52: #{_atten_forward_impl.1} parent=0 // pred_region
    _
  $region53: #{_atten_forward_impl.1} parent=0 // pred_fallthru
    _
  // Predicated region
  $region54: #{_atten_forward_impl.1} parent=0 // pred_check
    _
  $region55: #{_atten_forward_impl.1} parent=0 // pred_check_branch
    %46 = sbr.rel (0) target = $region57
  $region56: #{_atten_forward_impl.1} parent=0 // pred_region
    _
  $region57: #{_atten_forward_impl.1} parent=0 // pred_fallthru
    _
  %v47 = vld [vmem:[%s0] sm:$0xff]
  %v48 = vld [vmem:[%s0 + $0x8] sm:$0xff]
  %v49 = vld [vmem:[%s0 + $0x10] sm:$0xff]
  %v50 = vld [vmem:[%s0 + $0x18] sm:$0xff]
  %v51 = vld [vmem:[%s0 + $0x20] sm:$0xf]
  %v52 = vld [vmem:[%s0 + $0x28] sm:$0xf]
  %v53 = vld [vmem:[%s0 + $0x30] sm:$0xf]
  %v54 = vld [vmem:[%s0 + $0x38] sm:$0xf]
  %v55 = vld [vmem:[%s2] sm:$0xf]
  %v56 = vld [vmem:[%s3] sm:$0xf]
  %58 = vset.pattern.permute.xlu0 0
  %59 = vperm.xlu0 %58, %v56
  %v60 = vpop.permute.xlu0 %59
  %vm62 = vcmask 97280
  %v64 = vsel %vm62, %v55, 0
  %vm66 = vcmask 1043456
  %v68 = vsel %vm66, %v51, 0
  %v71 = vsel %vm66, %v52, 0
  %v74 = vsel %vm66, %v53, 0
  %v77 = vsel %vm66, %v54, 0
  %79 = vmatpush.msra.mxu0 0.0
  %80 = vmatpush.msra.mxu0 0.0
  %81 = vmatpush.msra.mxu0 0.0
  %82 = vmatpush.msra.mxu0 0.0
  %83 = vmatpush.msra.mxu0 0.0
  %84 = vmatpush.msra.mxu0 0.0
  %85 = vmatpush.msra.mxu0 0.0
  %86 = vmatpush.msra.mxu0 0.0
  %87 = vmatpush.msra.mxu0 0.0
  %88 = vmatpush.msra.mxu0 0.0
  %89 = vmatpush.msra.mxu0 0.0
  %90 = vmatpush.msra.mxu0 0.0
  %91 = vmatpush.msra.mxu0 0.0
  %92 = vmatpush.msra.mxu0 0.0
  %93 = vmatpush.msra.mxu0 %v68
  %94 = vmatpush.msra.mxu0 %v47
  %95 = vmatmul.f32.gmra.mxu0 %v64
  %v96 = vpop.f32.mrf.mxu0
  %v97 = vadd.f32 %v60, %v96
  %98 = vdwg.mxu0
  %99 = vmatpush.msra.mxu0 0.0
  %100 = vmatpush.msra.mxu0 0.0
  %101 = vmatpush.msra.mxu0 0.0
  %102 = vmatpush.msra.mxu0 0.0
  %103 = vmatpush.msra.mxu0 0.0
  %104 = vmatpush.msra.mxu0 0.0
  %105 = vmatpush.msra.mxu0 0.0
  %106 = vmatpush.msra.mxu0 0.0
  %107 = vmatpush.msra.mxu0 0.0
  %108 = vmatpush.msra.mxu0 0.0
  %109 = vmatpush.msra.mxu0 0.0
  %110 = vmatpush.msra.mxu0 0.0
  %111 = vmatpush.msra.mxu0 0.0
  %112 = vmatpush.msra.mxu0 0.0
  %113 = vmatpush.msra.mxu0 %v71
  %114 = vmatpush.msra.mxu0 %v48
  %115 = vmatmul.f32.gmra.mxu0 %v64
  %v116 = vpop.f32.mrf.mxu0
  %v117 = vadd.f32 %v60, %v116
  %118 = vdwg.mxu0
  %119 = vmatpush.msra.mxu0 0.0
  %120 = vmatpush.msra.mxu0 0.0
  %121 = vmatpush.msra.mxu0 0.0
  %122 = vmatpush.msra.mxu0 0.0
  %123 = vmatpush.msra.mxu0 0.0
  %124 = vmatpush.msra.mxu0 0.0
  %125 = vmatpush.msra.mxu0 0.0
  %126 = vmatpush.msra.mxu0 0.0
  %127 = vmatpush.msra.mxu0 0.0
  %128 = vmatpush.msra.mxu0 0.0
  %129 = vmatpush.msra.mxu0 0.0
  %130 = vmatpush.msra.mxu0 0.0
  %131 = vmatpush.msra.mxu0 0.0
  %132 = vmatpush.msra.mxu0 0.0
  %133 = vmatpush.msra.mxu0 %v74
  %134 = vmatpush.msra.mxu0 %v49
  %135 = vmatmul.f32.gmra.mxu0 %v64
  %v136 = vpop.f32.mrf.mxu0
  %v137 = vadd.f32 %v60, %v136
  %138 = vdwg.mxu0
  %139 = vmatpush.msra.mxu0 0.0
  %140 = vmatpush.msra.mxu0 0.0
  %141 = vmatpush.msra.mxu0 0.0
  %142 = vmatpush.msra.mxu0 0.0
  %143 = vmatpush.msra.mxu0 0.0
  %144 = vmatpush.msra.mxu0 0.0
  %145 = vmatpush.msra.mxu0 0.0
  %146 = vmatpush.msra.mxu0 0.0
  %147 = vmatpush.msra.mxu0 0.0
  %148 = vmatpush.msra.mxu0 0.0
  %149 = vmatpush.msra.mxu0 0.0
  %150 = vmatpush.msra.mxu0 0.0
  %151 = vmatpush.msra.mxu0 0.0
  %152 = vmatpush.msra.mxu0 0.0
  %153 = vmatpush.msra.mxu0 %v77
  %154 = vmatpush.msra.mxu0 %v50
  %155 = vmatmul.f32.gmra.mxu0 %v64
  %v156 = vpop.f32.mrf.mxu0
  %v157 = vadd.f32 %v60, %v156
  %158 = vdwg.mxu0
  %v159 = vmax.f32 %v97, 0.0
  %v160 = vmax.f32 %v117, 0.0
  %v161 = vmax.f32 %v137, 0.0
  %v162 = vmax.f32 %v157, 0.0
  %v163 = vld [vmem:[%s4] sm:$0xf]
  %v164 = vld [vmem:[%s5] sm:$0xf]
  %166 = vset.pattern.permute.xlu0 0
  %167 = vperm.xlu0 %166, %v164
  %v168 = vpop.permute.xlu0 %167
  %vm170 = vcmask 31744
  %v172 = vsel %vm170, %v163, 0
  %v175 = vsel %vm66, %v159, 0
  %v178 = vsel %vm66, %v160, 0
  %v181 = vsel %vm66, %v161, 0
  %v184 = vsel %vm66, %v162, 0
  %186 = vmatpush.msra.mxu0 0.0
  %187 = vmatpush.msra.mxu0 0.0
  %188 = vmatpush.msra.mxu0 0.0
  %189 = vmatpush.msra.mxu0 0.0
  %190 = vmatpush.msra.mxu0 0.0
  %191 = vmatpush.msra.mxu0 0.0
  %192 = vmatpush.msra.mxu0 0.0
  %193 = vmatpush.msra.mxu0 0.0
  %194 = vmatpush.msra.mxu0 0.0
  %195 = vmatpush.msra.mxu0 0.0
  %196 = vmatpush.msra.mxu0 0.0
  %197 = vmatpush.msra.mxu0 0.0
  %198 = vmatpush.msra.mxu0 0.0
  %199 = vmatpush.msra.mxu0 0.0
  %200 = vmatpush.msra.mxu0 0.0
  %201 = vmatpush.msra.mxu0 %v175
  %202 = vmatmul.f32.gmra.mxu0 %v172
  %v203 = vpop.f32.mrf.mxu0
  %v204 = vadd.f32 %v168, %v203
  %205 = vdwg.mxu0
  %206 = vmatpush.msra.mxu0 0.0
  %207 = vmatpush.msra.mxu0 0.0
  %208 = vmatpush.msra.mxu0 0.0
  %209 = vmatpush.msra.mxu0 0.0
  %210 = vmatpush.msra.mxu0 0.0
  %211 = vmatpush.msra.mxu0 0.0
  %212 = vmatpush.msra.mxu0 0.0
  %213 = vmatpush.msra.mxu0 0.0
  %214 = vmatpush.msra.mxu0 0.0
  %215 = vmatpush.msra.mxu0 0.0
  %216 = vmatpush.msra.mxu0 0.0
  %217 = vmatpush.msra.mxu0 0.0
  %218 = vmatpush.msra.mxu0 0.0
  %219 = vmatpush.msra.mxu0 0.0
  %220 = vmatpush.msra.mxu0 0.0
  %221 = vmatpush.msra.mxu0 %v178
  %222 = vmatmul.f32.gmra.mxu0 %v172
  %v223 = vpop.f32.mrf.mxu0
  %v224 = vadd.f32 %v168, %v223
  %225 = vdwg.mxu0
  %226 = vmatpush.msra.mxu0 0.0
  %227 = vmatpush.msra.mxu0 0.0
  %228 = vmatpush.msra.mxu0 0.0
  %229 = vmatpush.msra.mxu0 0.0
  %230 = vmatpush.msra.mxu0 0.0
  %231 = vmatpush.msra.mxu0 0.0
  %232 = vmatpush.msra.mxu0 0.0
  %233 = vmatpush.msra.mxu0 0.0
  %234 = vmatpush.msra.mxu0 0.0
  %235 = vmatpush.msra.mxu0 0.0
  %236 = vmatpush.msra.mxu0 0.0
  %237 = vmatpush.msra.mxu0 0.0
  %238 = vmatpush.msra.mxu0 0.0
  %239 = vmatpush.msra.mxu0 0.0
  %240 = vmatpush.msra.mxu0 0.0
  %241 = vmatpush.msra.mxu0 %v181
  %242 = vmatmul.f32.gmra.mxu0 %v172
  %v243 = vpop.f32.mrf.mxu0
  %v244 = vadd.f32 %v168, %v243
  %245 = vdwg.mxu0
  %246 = vmatpush.msra.mxu0 0.0
  %247 = vmatpush.msra.mxu0 0.0
  %248 = vmatpush.msra.mxu0 0.0
  %249 = vmatpush.msra.mxu0 0.0
  %250 = vmatpush.msra.mxu0 0.0
  %251 = vmatpush.msra.mxu0 0.0
  %252 = vmatpush.msra.mxu0 0.0
  %253 = vmatpush.msra.mxu0 0.0
  %254 = vmatpush.msra.mxu0 0.0
  %255 = vmatpush.msra.mxu0 0.0
  %256 = vmatpush.msra.mxu0 0.0
  %257 = vmatpush.msra.mxu0 0.0
  %258 = vmatpush.msra.mxu0 0.0
  %259 = vmatpush.msra.mxu0 0.0
  %260 = vmatpush.msra.mxu0 0.0
  %261 = vmatpush.msra.mxu0 %v184
  %262 = vmatmul.f32.gmra.mxu0 %v172
  %v263 = vpop.f32.mrf.mxu0
  %v264 = vadd.f32 %v168, %v263
  %265 = vdwg.mxu0
  %v266 = vmax.f32 %v204, 0.0
  %v267 = vmax.f32 %v224, 0.0
  %v268 = vmax.f32 %v244, 0.0
  %v269 = vmax.f32 %v264, 0.0
  %v270 = vld [vmem:[%s6] sm:$0x7]
  %v271 = vld [vmem:[%s7] sm:$0x7]
  %273 = vset.pattern.permute.xlu0 0
  %274 = vperm.xlu0 %273, %v271
  %v275 = vpop.permute.xlu0 %274
  %v278 = vsel %vm170, %v270, 0
  %v281 = vsel %vm66, %v266, 0
  %v284 = vsel %vm66, %v267, 0
  %v287 = vsel %vm66, %v268, 0
  %v290 = vsel %vm66, %v269, 0
  %292 = vmatpush.msra.mxu0 0.0
  %293 = vmatpush.msra.mxu0 0.0
  %294 = vmatpush.msra.mxu0 0.0
  %295 = vmatpush.msra.mxu0 0.0
  %296 = vmatpush.msra.mxu0 0.0
  %297 = vmatpush.msra.mxu0 0.0
  %298 = vmatpush.msra.mxu0 0.0
  %299 = vmatpush.msra.mxu0 0.0
  %300 = vmatpush.msra.mxu0 0.0
  %301 = vmatpush.msra.mxu0 0.0
  %302 = vmatpush.msra.mxu0 0.0
  %303 = vmatpush.msra.mxu0 0.0
  %304 = vmatpush.msra.mxu0 0.0
  %305 = vmatpush.msra.mxu0 0.0
  %306 = vmatpush.msra.mxu0 0.0
  %307 = vmatpush.msra.mxu0 %v281
  %308 = vmatmul.f32.gmra.mxu0 %v278
  %v309 = vpop.f32.mrf.mxu0
  %v310 = vadd.f32 %v275, %v309
  %311 = vdwg.mxu0
  %312 = vmatpush.msra.mxu0 0.0
  %313 = vmatpush.msra.mxu0 0.0
  %314 = vmatpush.msra.mxu0 0.0
  %315 = vmatpush.msra.mxu0 0.0
  %316 = vmatpush.msra.mxu0 0.0
  %317 = vmatpush.msra.mxu0 0.0
  %318 = vmatpush.msra.mxu0 0.0
  %319 = vmatpush.msra.mxu0 0.0
  %320 = vmatpush.msra.mxu0 0.0
  %321 = vmatpush.msra.mxu0 0.0
  %322 = vmatpush.msra.mxu0 0.0
  %323 = vmatpush.msra.mxu0 0.0
  %324 = vmatpush.msra.mxu0 0.0
  %325 = vmatpush.msra.mxu0 0.0
  %326 = vmatpush.msra.mxu0 0.0
  %327 = vmatpush.msra.mxu0 %v284
  %328 = vmatmul.f32.gmra.mxu0 %v278
  %v329 = vpop.f32.mrf.mxu0
  %v330 = vadd.f32 %v275, %v329
  %331 = vdwg.mxu0
  %332 = vmatpush.msra.mxu0 0.0
  %333 = vmatpush.msra.mxu0 0.0
  %334 = vmatpush.msra.mxu0 0.0
  %335 = vmatpush.msra.mxu0 0.0
  %336 = vmatpush.msra.mxu0 0.0
  %337 = vmatpush.msra.mxu0 0.0
  %338 = vmatpush.msra.mxu0 0.0
  %339 = vmatpush.msra.mxu0 0.0
  %340 = vmatpush.msra.mxu0 0.0
  %341 = vmatpush.msra.mxu0 0.0
  %342 = vmatpush.msra.mxu0 0.0
  %343 = vmatpush.msra.mxu0 0.0
  %344 = vmatpush.msra.mxu0 0.0
  %345 = vmatpush.msra.mxu0 0.0
  %346 = vmatpush.msra.mxu0 0.0
  %347 = vmatpush.msra.mxu0 %v287
  %348 = vmatmul.f32.gmra.mxu0 %v278
  %v349 = vpop.f32.mrf.mxu0
  %v350 = vadd.f32 %v275, %v349
  %351 = vdwg.mxu0
  %352 = vmatpush.msra.mxu0 0.0
  %353 = vmatpush.msra.mxu0 0.0
  %354 = vmatpush.msra.mxu0 0.0
  %355 = vmatpush.msra.mxu0 0.0
  %356 = vmatpush.msra.mxu0 0.0
  %357 = vmatpush.msra.mxu0 0.0
  %358 = vmatpush.msra.mxu0 0.0
  %359 = vmatpush.msra.mxu0 0.0
  %360 = vmatpush.msra.mxu0 0.0
  %361 = vmatpush.msra.mxu0 0.0
  %362 = vmatpush.msra.mxu0 0.0
  %363 = vmatpush.msra.mxu0 0.0
  %364 = vmatpush.msra.mxu0 0.0
  %365 = vmatpush.msra.mxu0 0.0
  %366 = vmatpush.msra.mxu0 0.0
  %367 = vmatpush.msra.mxu0 %v290
  %368 = vmatmul.f32.gmra.mxu0 %v278
  %v369 = vpop.f32.mrf.mxu0
  %v370 = vadd.f32 %v275, %v369
  %371 = vdwg.mxu0
  %v372 = vxor.u32 %v310, 2147483648
  %v373 = vxor.u32 %v330, 2147483648
  %v374 = vxor.u32 %v350, 2147483648
  %v375 = vxor.u32 %v370, 2147483648
  %v376 = vmul.f32 %v372, 1.442695
  %v377 = vpow.pop %v376
  %v378 = vmul.f32 %v373, 1.442695
  %v379 = vpow.pop %v378
  %v380 = vmul.f32 %v374, 1.442695
  %v381 = vpow.pop %v380
  %v382 = vmul.f32 %v375, 1.442695
  %v383 = vpow.pop %v382
  %v384 = vadd.f32 %v377, 1.0
  %v385 = vadd.f32 %v379, 1.0
  %v386 = vadd.f32 %v381, 1.0
  %v387 = vadd.f32 %v383, 1.0
  %v388 = vrcp.pop %v384
  %v389 = vmul.f32 %v384, %v388
  %v390 = vsub.f32 1.0, %v389
  %v391 = vmul.f32 %v388, %v390
  %v392 = vadd.f32 %v388, %v391
  %vm393 = vweird.f32 %v384
  %vm394 = vweird.f32 %v388
  %vm395 = vmor %vm393, %vm394
  %v396 = vsel %vm395, %v388, %v392
  %v397 = vand.u32 2147483647, %v384
  %vm398 = vcmp.eq.f32.partialorder %v397, 8.507059e+37
  %v399 = vand.u32 %v384, 2147483648
  %v400 = vor.u32 1.1754944e-38, %v399
  %v401 = vsel %vm398, %v400, %v396
  %v402 = vmul.f32 1.0, %v401
  %v403 = vrcp.pop %v385
  %v404 = vmul.f32 %v385, %v403
  %v405 = vsub.f32 1.0, %v404
  %v406 = vmul.f32 %v403, %v405
  %v407 = vadd.f32 %v403, %v406
  %vm408 = vweird.f32 %v385
  %vm409 = vweird.f32 %v403
  %vm410 = vmor %vm408, %vm409
  %v411 = vsel %vm410, %v403, %v407
  %v412 = vand.u32 2147483647, %v385
  %vm413 = vcmp.eq.f32.partialorder %v412, 8.507059e+37
  %v414 = vand.u32 %v385, 2147483648
  %v415 = vor.u32 1.1754944e-38, %v414
  %v416 = vsel %vm413, %v415, %v411
  %v417 = vmul.f32 1.0, %v416
  %v418 = vrcp.pop %v386
  %v419 = vmul.f32 %v386, %v418
  %v420 = vsub.f32 1.0, %v419
  %v421 = vmul.f32 %v418, %v420
  %v422 = vadd.f32 %v418, %v421
  %vm423 = vweird.f32 %v386
  %vm424 = vweird.f32 %v418
  %vm425 = vmor %vm423, %vm424
  %v426 = vsel %vm425, %v418, %v422
  %v427 = vand.u32 2147483647, %v386
  %vm428 = vcmp.eq.f32.partialorder %v427, 8.507059e+37
  %v429 = vand.u32 %v386, 2147483648
  %v430 = vor.u32 1.1754944e-38, %v429
  %v431 = vsel %vm428, %v430, %v426
  %v432 = vmul.f32 1.0, %v431
  %v433 = vrcp.pop %v387
  %v434 = vmul.f32 %v387, %v433
  %v435 = vsub.f32 1.0, %v434
  %v436 = vmul.f32 %v433, %v435
  %v437 = vadd.f32 %v433, %v436
  %vm438 = vweird.f32 %v387
  %vm439 = vweird.f32 %v433
  %vm440 = vmor %vm438, %vm439
  %v441 = vsel %vm440, %v433, %v437
  %v442 = vand.u32 2147483647, %v387
  %vm443 = vcmp.eq.f32.partialorder %v442, 8.507059e+37
  %v444 = vand.u32 %v387, 2147483648
  %v445 = vor.u32 1.1754944e-38, %v444
  %v446 = vsel %vm443, %v445, %v441
  %v447 = vmul.f32 1.0, %v446
  %v448 = vperm.slane %v402, 0
  %v449 = vperm.slane %v417, 0
  %v450 = vperm.slane %v432, 0
  %v451 = vperm.slane %v447, 0
  %v452 = vmul.f32 %v47, %v448
  %v453 = vmul.f32 %v48, %v449
  %v454 = vmul.f32 %v49, %v450
  %v455 = vmul.f32 %v50, %v451
  %v456 = vperm.slane %v402, 1
  %v457 = vperm.slane %v417, 1
  %v458 = vperm.slane %v432, 1
  %v459 = vperm.slane %v447, 1
  %v460 = vmul.f32 %v47, %v456
  %v461 = vmul.f32 %v48, %v457
  %v462 = vmul.f32 %v49, %v458
  %v463 = vmul.f32 %v50, %v459
  %v468 = vrot.slane %v460, 4
  %v469 = vrot.slane %v461, 4
  %v470 = vrot.slane %v462, 4
  %v471 = vrot.slane %v463, 4
  %v476 = vadd.f32 %v452, %v468
  %v477 = vadd.f32 %v453, %v469
  %v478 = vadd.f32 %v454, %v470
  %v479 = vadd.f32 %v455, %v471
  %v480 = vperm.slane %v402, 2
  %v481 = vperm.slane %v417, 2
  %v482 = vperm.slane %v432, 2
  %v483 = vperm.slane %v447, 2
  %v484 = vmul.f32 %v51, %v480
  %v485 = vmul.f32 %v52, %v481
  %v486 = vmul.f32 %v53, %v482
  %v487 = vmul.f32 %v54, %v483
  %v488 = vadd.f32 %v476, %v484
  %v489 = vadd.f32 %v477, %v485
  %v490 = vadd.f32 %v478, %v486
  %v491 = vadd.f32 %v479, %v487
  %v492 = vld [vmem:[%s1] sm:$0xff]
  %v493 = vld [vmem:[%s1 + $0x8] sm:$0xff]
  %v494 = vld [vmem:[%s1 + $0x10] sm:$0xff]
  %v495 = vld [vmem:[%s1 + $0x18] sm:$0xff]
  %v496 = vld [vmem:[%s1 + $0x20] sm:$0x1]
  %v497 = vld [vmem:[%s1 + $0x28] sm:$0x1]
  %v498 = vld [vmem:[%s1 + $0x30] sm:$0x1]
  %v499 = vld [vmem:[%s1 + $0x38] sm:$0x1]
  %501 = vrot.lane.b32.xlu0 %v491, 17
  %v502 = vpop.permute.xlu0 %501
  %507 = vrot.lane.b32.xlu0 %v488, 17
  %v508 = vpop.permute.xlu0 %507
  %509 = vrot.lane.b32.xlu0 %v489, 17
  %v510 = vpop.permute.xlu0 %509
  %511 = vrot.lane.b32.xlu0 %v490, 17
  %v512 = vpop.permute.xlu0 %511
  %vm513 = vcmask 138240
  %v514 = vsel %vm513, %v508, %v510
  %v515 = vsel %vm513, %v510, %v512
  %v516 = vsel %vm513, %v512, %v502
  %v521 = vsel %vm513, %v502, %v508
  %v522 = vperm.slane %v492, 0
  %v523 = vperm.slane %v493, 0
  %v524 = vperm.slane %v494, 0
  %v525 = vperm.slane %v495, 0
  %v526 = vmul.f32 %v521, %v522
  %v527 = vmul.f32 %v514, %v523
  %v528 = vmul.f32 %v515, %v524
  %v529 = vmul.f32 %v516, %v525
  %530 = vrot.lane.b32.xlu0 %v491, 16
  %v531 = vpop.permute.xlu0 %530
  %533 = vrot.lane.b32.xlu0 %v488, 16
  %v534 = vpop.permute.xlu0 %533
  %535 = vrot.lane.b32.xlu0 %v489, 16
  %v536 = vpop.permute.xlu0 %535
  %537 = vrot.lane.b32.xlu0 %v490, 16
  %v538 = vpop.permute.xlu0 %537
  %vm539 = vcmask 130048
  %v540 = vsel %vm539, %v534, %v536
  %v541 = vsel %vm539, %v536, %v538
  %v542 = vsel %vm539, %v538, %v531
  %v547 = vsel %vm539, %v531, %v534
  %v548 = vperm.slane %v492, 1
  %v549 = vperm.slane %v493, 1
  %v550 = vperm.slane %v494, 1
  %v551 = vperm.slane %v495, 1
  %v552 = vmul.f32 %v547, %v548
  %v553 = vmul.f32 %v540, %v549
  %v554 = vmul.f32 %v541, %v550
  %v555 = vmul.f32 %v542, %v551
  %556 = vrot.lane.b32.xlu0 %v491, 15
  %v557 = vpop.permute.xlu0 %556
  %559 = vrot.lane.b32.xlu0 %v488, 15
  %v560 = vpop.permute.xlu0 %559
  %561 = vrot.lane.b32.xlu0 %v489, 15
  %v562 = vpop.permute.xlu0 %561
  %563 = vrot.lane.b32.xlu0 %v490, 15
  %v564 = vpop.permute.xlu0 %563
  %vm565 = vcmask 121856
  %v566 = vsel %vm565, %v560, %v562
  %v567 = vsel %vm565, %v562, %v564
  %v568 = vsel %vm565, %v564, %v557
  %v573 = vsel %vm565, %v557, %v560
  %v574 = vperm.slane %v492, 2
  %v575 = vperm.slane %v493, 2
  %v576 = vperm.slane %v494, 2
  %v577 = vperm.slane %v495, 2
  %v578 = vmul.f32 %v573, %v574
  %v579 = vmul.f32 %v566, %v575
  %v580 = vmul.f32 %v567, %v576
  %v581 = vmul.f32 %v568, %v577
  %582 = vrot.lane.b32.xlu0 %v491, 1
  %v583 = vpop.permute.xlu0 %582
  %585 = vrot.lane.b32.xlu0 %v488, 1
  %v586 = vpop.permute.xlu0 %585
  %587 = vrot.lane.b32.xlu0 %v489, 1
  %v588 = vpop.permute.xlu0 %587
  %589 = vrot.lane.b32.xlu0 %v490, 1
  %v590 = vpop.permute.xlu0 %589
  %vm591 = vcmask 7168
  %v592 = vsel %vm591, %v586, %v588
  %v593 = vsel %vm591, %v588, %v590
  %v594 = vsel %vm591, %v590, %v583
  %v599 = vsel %vm591, %v583, %v586
  %v600 = vperm.slane %v492, 3
  %v601 = vperm.slane %v493, 3
  %v602 = vperm.slane %v494, 3
  %v603 = vperm.slane %v495, 3
  %v604 = vmul.f32 %v599, %v600
  %v605 = vmul.f32 %v592, %v601
  %v606 = vmul.f32 %v593, %v602
  %v607 = vmul.f32 %v594, %v603
  %v608 = vperm.slane %v492, 4
  %v609 = vperm.slane %v493, 4
  %v610 = vperm.slane %v494, 4
  %v611 = vperm.slane %v495, 4
  %v612 = vmul.f32 %v488, %v608
  %v613 = vmul.f32 %v489, %v609
  %v614 = vmul.f32 %v490, %v610
  %v615 = vmul.f32 %v491, %v611
  %616 = vrot.lane.b32.xlu0 %v488, 127
  %v617 = vpop.permute.xlu0 %616
  %618 = vrot.lane.b32.xlu0 %v489, 127
  %v619 = vpop.permute.xlu0 %618
  %620 = vrot.lane.b32.xlu0 %v490, 127
  %v621 = vpop.permute.xlu0 %620
  %622 = vrot.lane.b32.xlu0 %v491, 127
  %v623 = vpop.permute.xlu0 %622
  %vm624 = vcmask 1039360
  %v625 = vsel %vm624, %v617, %v619
  %v626 = vsel %vm624, %v619, %v621
  %v627 = vsel %vm624, %v621, %v623
  %v633 = vsel %vm624, %v623, %v617
  %v634 = vperm.slane %v492, 5
  %v635 = vperm.slane %v493, 5
  %v636 = vperm.slane %v494, 5
  %v637 = vperm.slane %v495, 5
  %v638 = vmul.f32 %v625, %v634
  %v639 = vmul.f32 %v626, %v635
  %v640 = vmul.f32 %v627, %v636
  %v641 = vmul.f32 %v633, %v637
  %642 = vrot.lane.b32.xlu0 %v488, 113
  %v643 = vpop.permute.xlu0 %642
  %644 = vrot.lane.b32.xlu0 %v489, 113
  %v645 = vpop.permute.xlu0 %644
  %646 = vrot.lane.b32.xlu0 %v490, 113
  %v647 = vpop.permute.xlu0 %646
  %648 = vrot.lane.b32.xlu0 %v491, 113
  %v649 = vpop.permute.xlu0 %648
  %vm650 = vcmask 924672
  %v651 = vsel %vm650, %v643, %v645
  %v652 = vsel %vm650, %v645, %v647
  %v653 = vsel %vm650, %v647, %v649
  %v659 = vsel %vm650, %v649, %v643
  %v660 = vperm.slane %v492, 6
  %v661 = vperm.slane %v493, 6
  %v662 = vperm.slane %v494, 6
  %v663 = vperm.slane %v495, 6
  %v664 = vmul.f32 %v651, %v660
  %v665 = vmul.f32 %v652, %v661
  %v666 = vmul.f32 %v653, %v662
  %v667 = vmul.f32 %v659, %v663
  %668 = vrot.lane.b32.xlu0 %v488, 112
  %v669 = vpop.permute.xlu0 %668
  %670 = vrot.lane.b32.xlu0 %v489, 112
  %v671 = vpop.permute.xlu0 %670
  %672 = vrot.lane.b32.xlu0 %v490, 112
  %v673 = vpop.permute.xlu0 %672
  %674 = vrot.lane.b32.xlu0 %v491, 112
  %v675 = vpop.permute.xlu0 %674
  %vm676 = vcmask 916480
  %v677 = vsel %vm676, %v669, %v671
  %v678 = vsel %vm676, %v671, %v673
  %v679 = vsel %vm676, %v673, %v675
  %v685 = vsel %vm676, %v675, %v669
  %v686 = vperm.slane %v492, 7
  %v687 = vperm.slane %v493, 7
  %v688 = vperm.slane %v494, 7
  %v689 = vperm.slane %v495, 7
  %v690 = vmul.f32 %v677, %v686
  %v691 = vmul.f32 %v678, %v687
  %v692 = vmul.f32 %v679, %v688
  %v693 = vmul.f32 %v685, %v689
  %694 = vrot.lane.b32.xlu0 %v488, 111
  %v695 = vpop.permute.xlu0 %694
  %696 = vrot.lane.b32.xlu0 %v489, 111
  %v697 = vpop.permute.xlu0 %696
  %698 = vrot.lane.b32.xlu0 %v490, 111
  %v699 = vpop.permute.xlu0 %698
  %700 = vrot.lane.b32.xlu0 %v491, 111
  %v701 = vpop.permute.xlu0 %700
  %vm702 = vcmask 908288
  %v703 = vsel %vm702, %v695, %v697
  %v704 = vsel %vm702, %v697, %v699
  %v705 = vsel %vm702, %v699, %v701
  %v711 = vsel %vm702, %v701, %v695
  %v712 = vperm.slane %v496, 0
  %v713 = vperm.slane %v497, 0
  %v714 = vperm.slane %v498, 0
  %v715 = vperm.slane %v499, 0
  %v716 = vmul.f32 %v703, %v712
  %v717 = vmul.f32 %v704, %v713
  %v718 = vmul.f32 %v705, %v714
  %v719 = vmul.f32 %v711, %v715
  %v724 = vrot.slane %v552, 4
  %v725 = vrot.slane %v553, 4
  %v726 = vrot.slane %v554, 4
  %v727 = vrot.slane %v555, 4
  %v736 = vrot.slane %v604, 4
  %v737 = vrot.slane %v605, 4
  %v738 = vrot.slane %v606, 4
  %v739 = vrot.slane %v607, 4
  %v748 = vrot.slane %v638, 4
  %v749 = vrot.slane %v639, 4
  %v750 = vrot.slane %v640, 4
  %v751 = vrot.slane %v641, 4
  %v760 = vrot.slane %v690, 4
  %v761 = vrot.slane %v691, 4
  %v762 = vrot.slane %v692, 4
  %v763 = vrot.slane %v693, 4
  %v768 = vsel %vm66, %v526, %v724
  %v769 = vsel %vm66, %v527, %v725
  %v770 = vsel %vm66, %v528, %v726
  %v771 = vsel %vm66, %v529, %v727
  %v772 = vsel %vm66, %v578, %v736
  %v773 = vsel %vm66, %v579, %v737
  %v774 = vsel %vm66, %v580, %v738
  %v775 = vsel %vm66, %v581, %v739
  %v776 = vsel %vm66, %v612, %v748
  %v777 = vsel %vm66, %v613, %v749
  %v778 = vsel %vm66, %v614, %v750
  %v779 = vsel %vm66, %v615, %v751
  %v780 = vsel %vm66, %v664, %v760
  %v781 = vsel %vm66, %v665, %v761
  %v782 = vsel %vm66, %v666, %v762
  %v783 = vsel %vm66, %v667, %v763
  %v784 = vld [vmem:[%s8] sm:$0xff]
  %v785 = vld [vmem:[%s9] sm:$0xff]
  %787 = vset.pattern.permute.xlu0 0
  %788 = vperm.xlu0 %787, %v785
  %v789 = vpop.permute.xlu0 %788
  %vm791 = vcmask 293888
  %v793 = vsel %vm791, %v784, 0
  %v796 = vsel %vm66, %v716, 0
  %v799 = vsel %vm66, %v717, 0
  %v802 = vsel %vm66, %v718, 0
  %v805 = vsel %vm66, %v719, 0
  %807 = vmatpush.msra.mxu0 0.0
  %808 = vmatpush.msra.mxu0 0.0
  %809 = vmatpush.msra.mxu0 0.0
  %810 = vmatpush.msra.mxu0 0.0
  %811 = vmatpush.msra.mxu0 0.0
  %812 = vmatpush.msra.mxu0 0.0
  %813 = vmatpush.msra.mxu0 0.0
  %814 = vmatpush.msra.mxu0 0.0
  %815 = vmatpush.msra.mxu0 0.0
  %816 = vmatpush.msra.mxu0 0.0
  %817 = vmatpush.msra.mxu0 0.0
  %818 = vmatpush.msra.mxu0 %v796
  %819 = vmatpush.msra.mxu0 %v780
  %820 = vmatpush.msra.mxu0 %v776
  %821 = vmatpush.msra.mxu0 %v772
  %822 = vmatpush.msra.mxu0 %v768
  %823 = vmatmul.f32.gmra.mxu0 %v793
  %v824 = vpop.f32.mrf.mxu0
  %v825 = vadd.f32 %v789, %v824
  %826 = vdwg.mxu0
  %827 = vmatpush.msra.mxu0 0.0
  %828 = vmatpush.msra.mxu0 0.0
  %829 = vmatpush.msra.mxu0 0.0
  %830 = vmatpush.msra.mxu0 0.0
  %831 = vmatpush.msra.mxu0 0.0
  %832 = vmatpush.msra.mxu0 0.0
  %833 = vmatpush.msra.mxu0 0.0
  %834 = vmatpush.msra.mxu0 0.0
  %835 = vmatpush.msra.mxu0 0.0
  %836 = vmatpush.msra.mxu0 0.0
  %837 = vmatpush.msra.mxu0 0.0
  %838 = vmatpush.msra.mxu0 %v799
  %839 = vmatpush.msra.mxu0 %v781
  %840 = vmatpush.msra.mxu0 %v777
  %841 = vmatpush.msra.mxu0 %v773
  %842 = vmatpush.msra.mxu0 %v769
  %843 = vmatmul.f32.gmra.mxu0 %v793
  %v844 = vpop.f32.mrf.mxu0
  %v845 = vadd.f32 %v789, %v844
  %846 = vdwg.mxu0
  %847 = vmatpush.msra.mxu0 0.0
  %848 = vmatpush.msra.mxu0 0.0
  %849 = vmatpush.msra.mxu0 0.0
  %850 = vmatpush.msra.mxu0 0.0
  %851 = vmatpush.msra.mxu0 0.0
  %852 = vmatpush.msra.mxu0 0.0
  %853 = vmatpush.msra.mxu0 0.0
  %854 = vmatpush.msra.mxu0 0.0
  %855 = vmatpush.msra.mxu0 0.0
  %856 = vmatpush.msra.mxu0 0.0
  %857 = vmatpush.msra.mxu0 0.0
  %858 = vmatpush.msra.mxu0 %v802
  %859 = vmatpush.msra.mxu0 %v782
  %860 = vmatpush.msra.mxu0 %v778
  %861 = vmatpush.msra.mxu0 %v774
  %862 = vmatpush.msra.mxu0 %v770
  %863 = vmatmul.f32.gmra.mxu0 %v793
  %v864 = vpop.f32.mrf.mxu0
  %v865 = vadd.f32 %v789, %v864
  %866 = vdwg.mxu0
  %867 = vmatpush.msra.mxu0 0.0
  %868 = vmatpush.msra.mxu0 0.0
  %869 = vmatpush.msra.mxu0 0.0
  %870 = vmatpush.msra.mxu0 0.0
  %871 = vmatpush.msra.mxu0 0.0
  %872 = vmatpush.msra.mxu0 0.0
  %873 = vmatpush.msra.mxu0 0.0
  %874 = vmatpush.msra.mxu0 0.0
  %875 = vmatpush.msra.mxu0 0.0
  %876 = vmatpush.msra.mxu0 0.0
  %877 = vmatpush.msra.mxu0 0.0
  %878 = vmatpush.msra.mxu0 %v805
  %879 = vmatpush.msra.mxu0 %v783
  %880 = vmatpush.msra.mxu0 %v779
  %881 = vmatpush.msra.mxu0 %v775
  %882 = vmatpush.msra.mxu0 %v771
  %883 = vmatmul.f32.gmra.mxu0 %v793
  %v884 = vpop.f32.mrf.mxu0
  %v885 = vadd.f32 %v789, %v884
  %886 = vdwg.mxu0
  %v887 = vmax.f32 %v825, 0.0
  %v888 = vmax.f32 %v845, 0.0
  %v889 = vmax.f32 %v865, 0.0
  %v890 = vmax.f32 %v885, 0.0
  %892 = vrot.lane.b32.xlu0 %v890, 17
  %v893 = vpop.permute.xlu0 %892
  %898 = vrot.lane.b32.xlu0 %v887, 17
  %v899 = vpop.permute.xlu0 %898
  %900 = vrot.lane.b32.xlu0 %v888, 17
  %v901 = vpop.permute.xlu0 %900
  %902 = vrot.lane.b32.xlu0 %v889, 17
  %v903 = vpop.permute.xlu0 %902
  %v904 = vsel %vm513, %v899, %v901
  %v905 = vsel %vm513, %v901, %v903
  %v906 = vsel %vm513, %v903, %v893
  %v911 = vsel %vm513, %v893, %v899
  %v912 = vmul.f32 %v911, %v522
  %v913 = vmul.f32 %v904, %v523
  %v914 = vmul.f32 %v905, %v524
  %v915 = vmul.f32 %v906, %v525
  %916 = vrot.lane.b32.xlu0 %v890, 16
  %v917 = vpop.permute.xlu0 %916
  %919 = vrot.lane.b32.xlu0 %v887, 16
  %v920 = vpop.permute.xlu0 %919
  %921 = vrot.lane.b32.xlu0 %v888, 16
  %v922 = vpop.permute.xlu0 %921
  %923 = vrot.lane.b32.xlu0 %v889, 16
  %v924 = vpop.permute.xlu0 %923
  %v925 = vsel %vm539, %v920, %v922
  %v926 = vsel %vm539, %v922, %v924
  %v927 = vsel %vm539, %v924, %v917
  %v932 = vsel %vm539, %v917, %v920
  %v933 = vmul.f32 %v932, %v548
  %v934 = vmul.f32 %v925, %v549
  %v935 = vmul.f32 %v926, %v550
  %v936 = vmul.f32 %v927, %v551
  %937 = vrot.lane.b32.xlu0 %v890, 15
  %v938 = vpop.permute.xlu0 %937
  %940 = vrot.lane.b32.xlu0 %v887, 15
  %v941 = vpop.permute.xlu0 %940
  %942 = vrot.lane.b32.xlu0 %v888, 15
  %v943 = vpop.permute.xlu0 %942
  %944 = vrot.lane.b32.xlu0 %v889, 15
  %v945 = vpop.permute.xlu0 %944
  %v946 = vsel %vm565, %v941, %v943
  %v947 = vsel %vm565, %v943, %v945
  %v948 = vsel %vm565, %v945, %v938
  %v953 = vsel %vm565, %v938, %v941
  %v954 = vmul.f32 %v953, %v574
  %v955 = vmul.f32 %v946, %v575
  %v956 = vmul.f32 %v947, %v576
  %v957 = vmul.f32 %v948, %v577
  %958 = vrot.lane.b32.xlu0 %v890, 1
  %v959 = vpop.permute.xlu0 %958
  %961 = vrot.lane.b32.xlu0 %v887, 1
  %v962 = vpop.permute.xlu0 %961
  %963 = vrot.lane.b32.xlu0 %v888, 1
  %v964 = vpop.permute.xlu0 %963
  %965 = vrot.lane.b32.xlu0 %v889, 1
  %v966 = vpop.permute.xlu0 %965
  %v967 = vsel %vm591, %v962, %v964
  %v968 = vsel %vm591, %v964, %v966
  %v969 = vsel %vm591, %v966, %v959
  %v974 = vsel %vm591, %v959, %v962
  %v975 = vmul.f32 %v974, %v600
  %v976 = vmul.f32 %v967, %v601
  %v977 = vmul.f32 %v968, %v602
  %v978 = vmul.f32 %v969, %v603
  %v979 = vmul.f32 %v887, %v608
  %v980 = vmul.f32 %v888, %v609
  %v981 = vmul.f32 %v889, %v610
  %v982 = vmul.f32 %v890, %v611
  %983 = vrot.lane.b32.xlu0 %v887, 127
  %v984 = vpop.permute.xlu0 %983
  %985 = vrot.lane.b32.xlu0 %v888, 127
  %v986 = vpop.permute.xlu0 %985
  %987 = vrot.lane.b32.xlu0 %v889, 127
  %v988 = vpop.permute.xlu0 %987
  %989 = vrot.lane.b32.xlu0 %v890, 127
  %v990 = vpop.permute.xlu0 %989
  %v991 = vsel %vm624, %v984, %v986
  %v992 = vsel %vm624, %v986, %v988
  %v993 = vsel %vm624, %v988, %v990
  %v999 = vsel %vm624, %v990, %v984
  %v1000 = vmul.f32 %v991, %v634
  %v1001 = vmul.f32 %v992, %v635
  %v1002 = vmul.f32 %v993, %v636
  %v1003 = vmul.f32 %v999, %v637
  %1004 = vrot.lane.b32.xlu0 %v887, 113
  %v1005 = vpop.permute.xlu0 %1004
  %1006 = vrot.lane.b32.xlu0 %v888, 113
  %v1007 = vpop.permute.xlu0 %1006
  %1008 = vrot.lane.b32.xlu0 %v889, 113
  %v1009 = vpop.permute.xlu0 %1008
  %1010 = vrot.lane.b32.xlu0 %v890, 113
  %v1011 = vpop.permute.xlu0 %1010
  %v1012 = vsel %vm650, %v1005, %v1007
  %v1013 = vsel %vm650, %v1007, %v1009
  %v1014 = vsel %vm650, %v1009, %v1011
  %v1020 = vsel %vm650, %v1011, %v1005
  %v1021 = vmul.f32 %v1012, %v660
  %v1022 = vmul.f32 %v1013, %v661
  %v1023 = vmul.f32 %v1014, %v662
  %v1024 = vmul.f32 %v1020, %v663
  %1025 = vrot.lane.b32.xlu0 %v887, 112
  %v1026 = vpop.permute.xlu0 %1025
  %1027 = vrot.lane.b32.xlu0 %v888, 112
  %v1028 = vpop.permute.xlu0 %1027
  %1029 = vrot.lane.b32.xlu0 %v889, 112
  %v1030 = vpop.permute.xlu0 %1029
  %1031 = vrot.lane.b32.xlu0 %v890, 112
  %v1032 = vpop.permute.xlu0 %1031
  %v1033 = vsel %vm676, %v1026, %v1028
  %v1034 = vsel %vm676, %v1028, %v1030
  %v1035 = vsel %vm676, %v1030, %v1032
  %v1041 = vsel %vm676, %v1032, %v1026
  %v1042 = vmul.f32 %v1033, %v686
  %v1043 = vmul.f32 %v1034, %v687
  %v1044 = vmul.f32 %v1035, %v688
  %v1045 = vmul.f32 %v1041, %v689
  %1046 = vrot.lane.b32.xlu0 %v887, 111
  %v1047 = vpop.permute.xlu0 %1046
  %1048 = vrot.lane.b32.xlu0 %v888, 111
  %v1049 = vpop.permute.xlu0 %1048
  %1050 = vrot.lane.b32.xlu0 %v889, 111
  %v1051 = vpop.permute.xlu0 %1050
  %1052 = vrot.lane.b32.xlu0 %v890, 111
  %v1053 = vpop.permute.xlu0 %1052
  %v1054 = vsel %vm702, %v1047, %v1049
  %v1055 = vsel %vm702, %v1049, %v1051
  %v1056 = vsel %vm702, %v1051, %v1053
  %v1062 = vsel %vm702, %v1053, %v1047
  %v1063 = vmul.f32 %v1054, %v712
  %v1064 = vmul.f32 %v1055, %v713
  %v1065 = vmul.f32 %v1056, %v714
  %v1066 = vmul.f32 %v1062, %v715
  %v1067 = vld [vmem:[%s10] sm:$0xff]
  %v1068 = vld [vmem:[%s11] sm:$0xff]
  %1070 = vset.pattern.permute.xlu0 0
  %1071 = vperm.xlu0 %1070, %v1068
  %v1072 = vpop.permute.xlu0 %1071
  %vm1074 = vcmask 588800
  %v1076 = vsel %vm1074, %v1067, 0
  %1078 = vmatpush.msra.mxu0 0.0
  %1079 = vmatpush.msra.mxu0 0.0
  %1080 = vmatpush.msra.mxu0 0.0
  %1081 = vmatpush.msra.mxu0 0.0
  %1082 = vmatpush.msra.mxu0 0.0
  %1083 = vmatpush.msra.mxu0 0.0
  %1084 = vmatpush.msra.mxu0 0.0
  %1085 = vmatpush.msra.mxu0 %v1063
  %1086 = vmatpush.msra.mxu0 %v1042
  %1087 = vmatpush.msra.mxu0 %v1021
  %1088 = vmatpush.msra.mxu0 %v1000
  %1089 = vmatpush.msra.mxu0 %v979
  %1090 = vmatpush.msra.mxu0 %v975
  %1091 = vmatpush.msra.mxu0 %v954
  %1092 = vmatpush.msra.mxu0 %v933
  %1093 = vmatpush.msra.mxu0 %v912
  %1094 = vmatmul.f32.gmra.mxu0 %v1076
  %v1095 = vpop.f32.mrf.mxu0
  %v1096 = vadd.f32 %v1072, %v1095
  %1097 = vdwg.mxu0
  %1098 = vmatpush.msra.mxu0 0.0
  %1099 = vmatpush.msra.mxu0 0.0
  %1100 = vmatpush.msra.mxu0 0.0
  %1101 = vmatpush.msra.mxu0 0.0
  %1102 = vmatpush.msra.mxu0 0.0
  %1103 = vmatpush.msra.mxu0 0.0
  %1104 = vmatpush.msra.mxu0 0.0
  %1105 = vmatpush.msra.mxu0 %v1064
  %1106 = vmatpush.msra.mxu0 %v1043
  %1107 = vmatpush.msra.mxu0 %v1022
  %1108 = vmatpush.msra.mxu0 %v1001
  %1109 = vmatpush.msra.mxu0 %v980
  %1110 = vmatpush.msra.mxu0 %v976
  %1111 = vmatpush.msra.mxu0 %v955
  %1112 = vmatpush.msra.mxu0 %v934
  %1113 = vmatpush.msra.mxu0 %v913
  %1114 = vmatmul.f32.gmra.mxu0 %v1076
  %v1115 = vpop.f32.mrf.mxu0
  %v1116 = vadd.f32 %v1072, %v1115
  %1117 = vdwg.mxu0
  %1118 = vmatpush.msra.mxu0 0.0
  %1119 = vmatpush.msra.mxu0 0.0
  %1120 = vmatpush.msra.mxu0 0.0
  %1121 = vmatpush.msra.mxu0 0.0
  %1122 = vmatpush.msra.mxu0 0.0
  %1123 = vmatpush.msra.mxu0 0.0
  %1124 = vmatpush.msra.mxu0 0.0
  %1125 = vmatpush.msra.mxu0 %v1065
  %1126 = vmatpush.msra.mxu0 %v1044
  %1127 = vmatpush.msra.mxu0 %v1023
  %1128 = vmatpush.msra.mxu0 %v1002
  %1129 = vmatpush.msra.mxu0 %v981
  %1130 = vmatpush.msra.mxu0 %v977
  %1131 = vmatpush.msra.mxu0 %v956
  %1132 = vmatpush.msra.mxu0 %v935
  %1133 = vmatpush.msra.mxu0 %v914
  %1134 = vmatmul.f32.gmra.mxu0 %v1076
  %v1135 = vpop.f32.mrf.mxu0
  %v1136 = vadd.f32 %v1072, %v1135
  %1137 = vdwg.mxu0
  %1138 = vmatpush.msra.mxu0 0.0
  %1139 = vmatpush.msra.mxu0 0.0
  %1140 = vmatpush.msra.mxu0 0.0
  %1141 = vmatpush.msra.mxu0 0.0
  %1142 = vmatpush.msra.mxu0 0.0
  %1143 = vmatpush.msra.mxu0 0.0
  %1144 = vmatpush.msra.mxu0 0.0
  %1145 = vmatpush.msra.mxu0 %v1066
  %1146 = vmatpush.msra.mxu0 %v1045
  %1147 = vmatpush.msra.mxu0 %v1024
  %1148 = vmatpush.msra.mxu0 %v1003
  %1149 = vmatpush.msra.mxu0 %v982
  %1150 = vmatpush.msra.mxu0 %v978
  %1151 = vmatpush.msra.mxu0 %v957
  %1152 = vmatpush.msra.mxu0 %v936
  %1153 = vmatpush.msra.mxu0 %v915
  %1154 = vmatmul.f32.gmra.mxu0 %v1076
  %v1155 = vpop.f32.mrf.mxu0
  %v1156 = vadd.f32 %v1072, %v1155
  %1157 = vdwg.mxu0
  %v1158 = vmax.f32 %v1096, 0.0
  %v1159 = vmax.f32 %v1116, 0.0
  %v1160 = vmax.f32 %v1136, 0.0
  %v1161 = vmax.f32 %v1156, 0.0
  %1163 = vrot.lane.b32.xlu0 %v1161, 17
  %v1164 = vpop.permute.xlu0 %1163
  %1169 = vrot.lane.b32.xlu0 %v1158, 17
  %v1170 = vpop.permute.xlu0 %1169
  %1171 = vrot.lane.b32.xlu0 %v1159, 17
  %v1172 = vpop.permute.xlu0 %1171
  %1173 = vrot.lane.b32.xlu0 %v1160, 17
  %v1174 = vpop.permute.xlu0 %1173
  %v1175 = vsel %vm513, %v1170, %v1172
  %v1176 = vsel %vm513, %v1172, %v1174
  %v1177 = vsel %vm513, %v1174, %v1164
  %v1182 = vsel %vm513, %v1164, %v1170
  %v1183 = vmul.f32 %v1182, %v522
  %v1184 = vmul.f32 %v1175, %v523
  %v1185 = vmul.f32 %v1176, %v524
  %v1186 = vmul.f32 %v1177, %v525
  %1187 = vrot.lane.b32.xlu0 %v1161, 16
  %v1188 = vpop.permute.xlu0 %1187
  %1190 = vrot.lane.b32.xlu0 %v1158, 16
  %v1191 = vpop.permute.xlu0 %1190
  %1192 = vrot.lane.b32.xlu0 %v1159, 16
  %v1193 = vpop.permute.xlu0 %1192
  %1194 = vrot.lane.b32.xlu0 %v1160, 16
  %v1195 = vpop.permute.xlu0 %1194
  %v1196 = vsel %vm539, %v1191, %v1193
  %v1197 = vsel %vm539, %v1193, %v1195
  %v1198 = vsel %vm539, %v1195, %v1188
  %v1203 = vsel %vm539, %v1188, %v1191
  %v1204 = vmul.f32 %v1203, %v548
  %v1205 = vmul.f32 %v1196, %v549
  %v1206 = vmul.f32 %v1197, %v550
  %v1207 = vmul.f32 %v1198, %v551
  %1208 = vrot.lane.b32.xlu0 %v1161, 15
  %v1209 = vpop.permute.xlu0 %1208
  %1211 = vrot.lane.b32.xlu0 %v1158, 15
  %v1212 = vpop.permute.xlu0 %1211
  %1213 = vrot.lane.b32.xlu0 %v1159, 15
  %v1214 = vpop.permute.xlu0 %1213
  %1215 = vrot.lane.b32.xlu0 %v1160, 15
  %v1216 = vpop.permute.xlu0 %1215
  %v1217 = vsel %vm565, %v1212, %v1214
  %v1218 = vsel %vm565, %v1214, %v1216
  %v1219 = vsel %vm565, %v1216, %v1209
  %v1224 = vsel %vm565, %v1209, %v1212
  %v1225 = vmul.f32 %v1224, %v574
  %v1226 = vmul.f32 %v1217, %v575
  %v1227 = vmul.f32 %v1218, %v576
  %v1228 = vmul.f32 %v1219, %v577
  %1229 = vrot.lane.b32.xlu0 %v1161, 1
  %v1230 = vpop.permute.xlu0 %1229
  %1232 = vrot.lane.b32.xlu0 %v1158, 1
  %v1233 = vpop.permute.xlu0 %1232
  %1234 = vrot.lane.b32.xlu0 %v1159, 1
  %v1235 = vpop.permute.xlu0 %1234
  %1236 = vrot.lane.b32.xlu0 %v1160, 1
  %v1237 = vpop.permute.xlu0 %1236
  %v1238 = vsel %vm591, %v1233, %v1235
  %v1239 = vsel %vm591, %v1235, %v1237
  %v1240 = vsel %vm591, %v1237, %v1230
  %v1245 = vsel %vm591, %v1230, %v1233
  %v1246 = vmul.f32 %v1245, %v600
  %v1247 = vmul.f32 %v1238, %v601
  %v1248 = vmul.f32 %v1239, %v602
  %v1249 = vmul.f32 %v1240, %v603
  %v1250 = vmul.f32 %v1158, %v608
  %v1251 = vmul.f32 %v1159, %v609
  %v1252 = vmul.f32 %v1160, %v610
  %v1253 = vmul.f32 %v1161, %v611
  %1254 = vrot.lane.b32.xlu0 %v1158, 127
  %v1255 = vpop.permute.xlu0 %1254
  %1256 = vrot.lane.b32.xlu0 %v1159, 127
  %v1257 = vpop.permute.xlu0 %1256
  %1258 = vrot.lane.b32.xlu0 %v1160, 127
  %v1259 = vpop.permute.xlu0 %1258
  %1260 = vrot.lane.b32.xlu0 %v1161, 127
  %v1261 = vpop.permute.xlu0 %1260
  %v1262 = vsel %vm624, %v1255, %v1257
  %v1263 = vsel %vm624, %v1257, %v1259
  %v1264 = vsel %vm624, %v1259, %v1261
  %v1270 = vsel %vm624, %v1261, %v1255
  %v1271 = vmul.f32 %v1262, %v634
  %v1272 = vmul.f32 %v1263, %v635
  %v1273 = vmul.f32 %v1264, %v636
  %v1274 = vmul.f32 %v1270, %v637
  %1275 = vrot.lane.b32.xlu0 %v1158, 113
  %v1276 = vpop.permute.xlu0 %1275
  %1277 = vrot.lane.b32.xlu0 %v1159, 113
  %v1278 = vpop.permute.xlu0 %1277
  %1279 = vrot.lane.b32.xlu0 %v1160, 113
  %v1280 = vpop.permute.xlu0 %1279
  %1281 = vrot.lane.b32.xlu0 %v1161, 113
  %v1282 = vpop.permute.xlu0 %1281
  %v1283 = vsel %vm650, %v1276, %v1278
  %v1284 = vsel %vm650, %v1278, %v1280
  %v1285 = vsel %vm650, %v1280, %v1282
  %v1291 = vsel %vm650, %v1282, %v1276
  %v1292 = vmul.f32 %v1283, %v660
  %v1293 = vmul.f32 %v1284, %v661
  %v1294 = vmul.f32 %v1285, %v662
  %v1295 = vmul.f32 %v1291, %v663
  %1296 = vrot.lane.b32.xlu0 %v1158, 112
  %v1297 = vpop.permute.xlu0 %1296
  %1298 = vrot.lane.b32.xlu0 %v1159, 112
  %v1299 = vpop.permute.xlu0 %1298
  %1300 = vrot.lane.b32.xlu0 %v1160, 112
  %v1301 = vpop.permute.xlu0 %1300
  %1302 = vrot.lane.b32.xlu0 %v1161, 112
  %v1303 = vpop.permute.xlu0 %1302
  %v1304 = vsel %vm676, %v1297, %v1299
  %v1305 = vsel %vm676, %v1299, %v1301
  %v1306 = vsel %vm676, %v1301, %v1303
  %v1312 = vsel %vm676, %v1303, %v1297
  %v1313 = vmul.f32 %v1304, %v686
  %v1314 = vmul.f32 %v1305, %v687
  %v1315 = vmul.f32 %v1306, %v688
  %v1316 = vmul.f32 %v1312, %v689
  %1317 = vrot.lane.b32.xlu0 %v1158, 111
  %v1318 = vpop.permute.xlu0 %1317
  %1319 = vrot.lane.b32.xlu0 %v1159, 111
  %v1320 = vpop.permute.xlu0 %1319
  %1321 = vrot.lane.b32.xlu0 %v1160, 111
  %v1322 = vpop.permute.xlu0 %1321
  %1323 = vrot.lane.b32.xlu0 %v1161, 111
  %v1324 = vpop.permute.xlu0 %1323
  %v1325 = vsel %vm702, %v1318, %v1320
  %v1326 = vsel %vm702, %v1320, %v1322
  %v1327 = vsel %vm702, %v1322, %v1324
  %v1333 = vsel %vm702, %v1324, %v1318
  %v1334 = vmul.f32 %v1325, %v712
  %v1335 = vmul.f32 %v1326, %v713
  %v1336 = vmul.f32 %v1327, %v714
  %v1337 = vmul.f32 %v1333, %v715
  %v1338 = vld [vmem:[%s12] sm:$0xf]
  %v1339 = vld [vmem:[%s13] sm:$0xf]
  %1341 = vset.pattern.permute.xlu0 0
  %1342 = vperm.xlu0 %1341, %v1339
  %v1343 = vpop.permute.xlu0 %1342
  %v1346 = vsel %vm1074, %v1338, 0
  %1348 = vmatpush.msra.mxu0 0.0
  %1349 = vmatpush.msra.mxu0 0.0
  %1350 = vmatpush.msra.mxu0 0.0
  %1351 = vmatpush.msra.mxu0 0.0
  %1352 = vmatpush.msra.mxu0 0.0
  %1353 = vmatpush.msra.mxu0 0.0
  %1354 = vmatpush.msra.mxu0 0.0
  %1355 = vmatpush.msra.mxu0 %v1334
  %1356 = vmatpush.msra.mxu0 %v1313
  %1357 = vmatpush.msra.mxu0 %v1292
  %1358 = vmatpush.msra.mxu0 %v1271
  %1359 = vmatpush.msra.mxu0 %v1250
  %1360 = vmatpush.msra.mxu0 %v1246
  %1361 = vmatpush.msra.mxu0 %v1225
  %1362 = vmatpush.msra.mxu0 %v1204
  %1363 = vmatpush.msra.mxu0 %v1183
  %1364 = vmatmul.f32.gmra.mxu0 %v1346
  %v1365 = vpop.f32.mrf.mxu0
  %v1366 = vadd.f32 %v1343, %v1365
  %1367 = vdwg.mxu0
  %1368 = vmatpush.msra.mxu0 0.0
  %1369 = vmatpush.msra.mxu0 0.0
  %1370 = vmatpush.msra.mxu0 0.0
  %1371 = vmatpush.msra.mxu0 0.0
  %1372 = vmatpush.msra.mxu0 0.0
  %1373 = vmatpush.msra.mxu0 0.0
  %1374 = vmatpush.msra.mxu0 0.0
  %1375 = vmatpush.msra.mxu0 %v1335
  %1376 = vmatpush.msra.mxu0 %v1314
  %1377 = vmatpush.msra.mxu0 %v1293
  %1378 = vmatpush.msra.mxu0 %v1272
  %1379 = vmatpush.msra.mxu0 %v1251
  %1380 = vmatpush.msra.mxu0 %v1247
  %1381 = vmatpush.msra.mxu0 %v1226
  %1382 = vmatpush.msra.mxu0 %v1205
  %1383 = vmatpush.msra.mxu0 %v1184
  %1384 = vmatmul.f32.gmra.mxu0 %v1346
  %v1385 = vpop.f32.mrf.mxu0
  %v1386 = vadd.f32 %v1343, %v1385
  %1387 = vdwg.mxu0
  %1388 = vmatpush.msra.mxu0 0.0
  %1389 = vmatpush.msra.mxu0 0.0
  %1390 = vmatpush.msra.mxu0 0.0
  %1391 = vmatpush.msra.mxu0 0.0
  %1392 = vmatpush.msra.mxu0 0.0
  %1393 = vmatpush.msra.mxu0 0.0
  %1394 = vmatpush.msra.mxu0 0.0
  %1395 = vmatpush.msra.mxu0 %v1336
  %1396 = vmatpush.msra.mxu0 %v1315
  %1397 = vmatpush.msra.mxu0 %v1294
  %1398 = vmatpush.msra.mxu0 %v1273
  %1399 = vmatpush.msra.mxu0 %v1252
  %1400 = vmatpush.msra.mxu0 %v1248
  %1401 = vmatpush.msra.mxu0 %v1227
  %1402 = vmatpush.msra.mxu0 %v1206
  %1403 = vmatpush.msra.mxu0 %v1185
  %1404 = vmatmul.f32.gmra.mxu0 %v1346
  %v1405 = vpop.f32.mrf.mxu0
  %v1406 = vadd.f32 %v1343, %v1405
  %1407 = vdwg.mxu0
  %1408 = vmatpush.msra.mxu0 0.0
  %1409 = vmatpush.msra.mxu0 0.0
  %1410 = vmatpush.msra.mxu0 0.0
  %1411 = vmatpush.msra.mxu0 0.0
  %1412 = vmatpush.msra.mxu0 0.0
  %1413 = vmatpush.msra.mxu0 0.0
  %1414 = vmatpush.msra.mxu0 0.0
  %1415 = vmatpush.msra.mxu0 %v1337
  %1416 = vmatpush.msra.mxu0 %v1316
  %1417 = vmatpush.msra.mxu0 %v1295
  %1418 = vmatpush.msra.mxu0 %v1274
  %1419 = vmatpush.msra.mxu0 %v1253
  %1420 = vmatpush.msra.mxu0 %v1249
  %1421 = vmatpush.msra.mxu0 %v1228
  %1422 = vmatpush.msra.mxu0 %v1207
  %1423 = vmatpush.msra.mxu0 %v1186
  %1424 = vmatmul.f32.gmra.mxu0 %v1346
  %v1425 = vpop.f32.mrf.mxu0
  %v1426 = vadd.f32 %v1343, %v1425
  %1427 = vdwg.mxu0
  %v1428 = vmax.f32 %v1366, 0.0
  %v1429 = vmax.f32 %v1386, 0.0
  %v1430 = vmax.f32 %v1406, 0.0
  %v1431 = vmax.f32 %v1426, 0.0
  %v1436 = vrot.slane %v1429, 4
  %v1437 = vrot.slane %v1431, 4
  %v1438 = vsel %vm66, %v1428, %v1436
  %v1439 = vsel %vm66, %v1430, %v1437
  %1442 = vst [vmem:[%s14] sm:$0xff] %v1438
  %1443 = vst [vmem:[%s14 + $0x8] sm:$0xff] %v1439
  // Predicated region
  $region58: #{_atten_forward_impl.1} parent=0 // pred_check
    _
  $region59: #{_atten_forward_impl.1} parent=0 // pred_check_branch
    %1445 = sbr.rel (0) target = $region61
  $region60: #{_atten_forward_impl.1} parent=0 // pred_region
    _
  $region61: #{_atten_forward_impl.1} parent=0 // pred_fallthru
    _
  // Predicated region
  $region62: #{_atten_forward_impl.1} parent=0 // pred_check
    _
  $region63: #{_atten_forward_impl.1} parent=0 // pred_check_branch
    %1447 = sbr.rel (0) target = $region65
  $region64: #{_atten_forward_impl.1} parent=0 // pred_region
    _
  $region65: #{_atten_forward_impl.1} parent=0 // pred_fallthru
    _

</llo_original>
